<compile_context>
chip_gen: v7x
topology: tpu7x:2x2x1
jax: 0.10.0
libtpu: 0.0.40
codegen_flags: <defaults>
</compile_context>

<pallas_src>
import math
import numpy as np
import jax
import jax.numpy as jnp
from jax.experimental import pallas as pl
from jax.experimental.pallas import tpu as pltpu


def make_mh_kernel(iters_per_block):
    """Kernel factory: `iters_per_block` statically unrolled MH steps/grid step."""

    def mh_kernel(flip_ref, logu_ref, init_ref, w1_ref, b1_ref, w2_ref,
                  b2_ref, states_ref, curr_ref, logp_ref):
        """Runs `iters_per_block` Metropolis-Hastings iterations.

        flip_ref  : (T, CB, 1) int32  spin index to flip per (iter, chain)
        logu_ref  : (T, CB, 1) f32    0.5*log(uniform) accept coins
        init_ref  : (CB, S)    f32    initial spin configuration
        w1_ref    : (S, H), b1_ref: (1, H), w2_ref: (H, 1)   [VMEM]
        b2_ref    : (1, 1) f32 scalar in SMEM
        states_ref: (CB, T*S)  f32    lane-dense chain-major output block
        curr_ref  : (CB, S)    f32    VMEM scratch: chain state carry
        logp_ref  : (CB, 1)    f32    VMEM scratch: log_psi(curr) carry
        """
        chunk_id = pl.program_id(1)
        cb, s = curr_ref.shape

        # Hoist parameter loads out of the unrolled loop.
        w1 = w1_ref[...]
        b1 = b1_ref[...]
        w2 = w2_ref[...]
        b2 = b2_ref[0, 0]

        def log_psi(x):
            h = jnp.tanh(
                jnp.dot(x, w1, preferred_element_type=jnp.float32) + b1)
            # TODO(synk): an (H,1) MXU dot uses 1/256 of the array width; a
            # VPU mul + lane reduce is faster but not bit-identical to the
            # XLA reference, so the MXU dot is kept for exact verification.
            return jnp.dot(h, w2, preferred_element_type=jnp.float32) + b2

        @pl.when(chunk_id == 0)
        def _():
            curr_ref[...] = init_ref[...]
            logp_ref[...] = log_psi(init_ref[...])

        # Lane-index grid for building the single-spin-flip proposal.
        lane = jax.lax.broadcasted_iota(jnp.int32, (cb, s), 1)

        # Register carry across the statically unrolled chunk: no per-step
        # VMEM round trip sits on the serial MH dependence chain.
        curr = curr_ref[...]
        logp = logp_ref[...]
        for t in range(iters_per_block):
            prop = jnp.where(lane == flip_ref[t], -curr, curr)   # 1 select
            logp_prop = log_psi(prop)              # only MLP eval this step
            accepts = logu_ref[t] < (logp_prop - logp)   # log-space coin
            curr = jnp.where(accepts, prop, curr)
            logp = jnp.where(accepts, logp_prop, logp)
            # Lane-dense chain-major store at a static lane offset.
            states_ref[:, t * s:(t + 1) * s] = curr
        curr_ref[...] = curr
        logp_ref[...] = logp

    return mh_kernel


def metropolis_hasting_forward(init_state, flip_idx, unifs, w1, b1, w2, b2,
                               *, batch_size, burn_in, max_chunk=128,
                               chain_block=None):
    """Runs the full MH chain and returns (samples, final_state).

    samples: (batch_size, state_size), matching the PyTorch forward():
      states[:, burn_in:, :].reshape(-1, S)[:batch_size]
    final_state: (num_chains, state_size) == states[:, -1, :] (self.init).
    """
    iters, num_chains = flip_idx.shape[0], flip_idx.shape[1]
    state_size = init_state.shape[-1]

    # --- chain blocking: on v7x pick >=2 blocks so the "parallel" chain axis
    #     can shard across both TensorCores (no-op on single-TC v5e/v6e). ---
    if chain_block is None:
        if num_chains >= 16 and num_chains % 16 == 0:
            chain_block = num_chains // 2
        else:
            chain_block = num_chains
    assert num_chains % chain_block == 0, "chain_block must divide num_chains"
    assert chain_block % 8 == 0 or chain_block == num_chains, (
        "chain_block must be a multiple of 8 sublanes (or equal num_chains)")
    num_cb = num_chains // chain_block

    # --- iteration chunking: lane-dense output blocks need chunk*S % 128 == 0
    #     unless there is a single full-extent chunk. ---
    lane_unit = 128 // math.gcd(state_size, 128)
    if iters <= max_chunk:
        chunk = iters
    else:
        chunk = max(lane_unit, (max_chunk // lane_unit) * lane_unit)
    num_chunks = -(-iters // chunk)
    iters_pad = num_chunks * chunk

    # Log-space accept coin: 0.5*log(u) < transition  <=>  u < min(exp(2T), 1).
    # Removes the per-step exp from the serial critical path.
    logu = 0.5 * jnp.log(unifs.astype(jnp.float32))

    if iters_pad != iters:
        pad = iters_pad - iters
        # Padded iterations flip index == state_size (matches no lane), so
        # prop == curr and the chain state is unchanged; rows sliced off below.
        flip_idx = jnp.concatenate(
            [flip_idx,
             jnp.full((pad, num_chains, 1), state_size, jnp.int32)], axis=0)
        logu = jnp.concatenate(
            [logu, jnp.full((pad, num_chains, 1), -1.0, jnp.float32)], axis=0)

    grid_spec = pltpu.PrefetchScalarGridSpec(
        num_scalar_prefetch=0,
        grid=(num_cb, num_chunks),
        in_specs=[
            pl.BlockSpec((chunk, chain_block, 1), lambda cb, c: (c, cb, 0)),
            pl.BlockSpec((chunk, chain_block, 1), lambda cb, c: (c, cb, 0)),
            pl.BlockSpec((chain_block, state_size), lambda cb, c: (cb, 0)),
            pl.BlockSpec(w1.shape, lambda cb, c: (0, 0)),
            pl.BlockSpec(b1.shape, lambda cb, c: (0, 0)),
            pl.BlockSpec(w2.shape, lambda cb, c: (0, 0)),
            pl.BlockSpec(memory_space=pltpu.MemorySpace.SMEM),   # b2 scalar
        ],
        # Lane-dense chain-major output slab (C, T*S); reshaped in the wrapper.
        out_specs=pl.BlockSpec((chain_block, chunk * state_size),
                               lambda cb, c: (cb, c)),
        scratch_shapes=[
            pltpu.VMEM((chain_block, state_size), jnp.float32),  # curr carry
            pltpu.VMEM((chain_block, 1), jnp.float32),           # log_psi carry
        ],
    )

    states2d = pl.pallas_call(
        make_mh_kernel(chunk),
        out_shape=jax.ShapeDtypeStruct(
            (num_chains, iters_pad * state_size), jnp.float32),
        grid_spec=grid_spec,
        compiler_params=pltpu.CompilerParams(
            dimension_semantics=("parallel", "arbitrary"),
            vmem_limit_bytes=32 * 1024 * 1024),
    )(flip_idx, logu, init_state, w1, b1, w2, b2)

    states = states2d.reshape(num_chains, iters_pad, state_size)
    samples = states[:, burn_in:iters, :].reshape(-1, state_size)[:batch_size]
    final_state = states[:, iters - 1, :]
    return samples, final_state


def _pure_jax_reference(init_state, flip_idx, unifs, w1, b1, w2, b2,
                        batch_size, burn_in):
    state_size = init_state.shape[-1]
    lane = jnp.arange(state_size, dtype=jnp.int32)[None, :]
    logu = 0.5 * jnp.log(unifs.astype(jnp.float32))

    def log_psi(x):
        return jnp.tanh(x @ w1 + b1) @ w2 + b2[0, 0]

    def step(curr, xs):
        idx, lu = xs
        prop = jnp.where(lane == idx, -curr, curr)
        accepts = lu < (log_psi(prop) - log_psi(curr))
        nxt = jnp.where(accepts, prop, curr)
        return nxt, nxt

    _, states = jax.lax.scan(step, init_state, (flip_idx, logu))
    states_cis = jnp.transpose(states, (1, 0, 2))
    keep = states_cis[:, burn_in:, :].reshape(-1, state_size)
    return keep[:batch_size], states_cis[:, -1, :]


if __name__ == "__main__":
    def run_case(seed, num_chains, state_size, hidden, batch_size, burn_in,
                 **kwargs):
        iters = int(np.ceil(batch_size / num_chains) + burn_in)
        key = jax.random.PRNGKey(seed)
        k_init, k_flip, k_unif, kw1, kb1, kw2, kb2 = jax.random.split(key, 7)

        # Initial spin configuration: random {-1, +1}.
        init_state = (jax.random.randint(
            k_init, (num_chains, state_size), 0, 2) * 2 - 1).astype(jnp.float32)
        # Proposal: one random flip index per (iteration, chain).
        flip_idx = jax.random.randint(k_flip, (iters, num_chains, 1), 0,
                                      state_size).astype(jnp.int32)
        # Uniform draws for the acceptance coin.
        unifs = jax.random.uniform(k_unif, (iters, num_chains, 1),
                                   dtype=jnp.float32)
        # Deterministic synthetic wave_fn (small MLP) parameters.
        w1 = (jax.random.normal(kw1, (state_size, hidden)) * 0.1).astype(jnp.float32)
        b1 = (jax.random.normal(kb1, (1, hidden)) * 0.1).astype(jnp.float32)
        w2 = (jax.random.normal(kw2, (hidden, 1)) * 0.1).astype(jnp.float32)
        b2 = (jax.random.normal(kb2, (1, 1)) * 0.1).astype(jnp.float32)

        samples, final_state = metropolis_hasting_forward(
            init_state, flip_idx, unifs, w1, b1, w2, b2,
            batch_size=batch_size, burn_in=burn_in, **kwargs)
        samples = jax.block_until_ready(samples)
        final_state = jax.block_until_ready(final_state)

        ref_samples, ref_final = _pure_jax_reference(
            init_state, flip_idx, unifs, w1, b1, w2, b2, batch_size, burn_in)
        np.testing.assert_allclose(np.asarray(samples), np.asarray(ref_samples),
                                   rtol=0, atol=0)
        np.testing.assert_allclose(np.asarray(final_state),
                                   np.asarray(ref_final), rtol=0, atol=0)
        assert samples.shape == (batch_size, state_size)
        assert final_state.shape == (num_chains, state_size)

    # Case 1: module-default small shapes (single chunk, single chain block).
    run_case(0, num_chains=8, state_size=16, hidden=32, batch_size=16,
             burn_in=4)
    # Case 2: exercises chain blocking (2 blocks -> megacore-shardable on v7x),
    # multi-chunk iteration carry, and iteration padding.
    run_case(1, num_chains=16, state_size=16, hidden=32, batch_size=192,
             burn_in=8, max_chunk=8)

    print("KERNEL_OK")
</pallas_src>

<mosaic_0001>
module attributes {stable_mosaic.version = 11 : i64} {
  func.func @mh_kernel(%arg0: i32, %arg1: i32, %arg2: memref<6x8x1xi32, #tpu.memory_space<vmem>>, %arg3: memref<6x8x1xf32, #tpu.memory_space<vmem>>, %arg4: memref<8x16xf32, #tpu.memory_space<vmem>>, %arg5: memref<16x32xf32, #tpu.memory_space<vmem>>, %arg6: memref<1x32xf32, #tpu.memory_space<vmem>>, %arg7: memref<32x1xf32, #tpu.memory_space<vmem>>, %arg8: memref<1x1xf32, #tpu.memory_space<smem>>, %arg9: memref<8x96xf32, #tpu.memory_space<vmem>>, %arg10: memref<8x16xf32, #tpu.memory_space<vmem>>, %arg11: memref<8x1xf32, #tpu.memory_space<vmem>>) attributes {dimension_semantics = [#tpu.dimension_semantics<parallel>, #tpu.dimension_semantics<arbitrary>], iteration_bounds = array<i64: 1, 1>, scalar_prefetch = 0 : i64, scratch_operands = 2 : i64, tpu.core_type = #tpu.core_type<tc>, window_params = [{transform_indices = @transform_0, window_bounds = array<i64: 6, 8, 1>}, {transform_indices = @transform_1, window_bounds = array<i64: 6, 8, 1>}, {transform_indices = @transform_2, window_bounds = array<i64: 8, 16>}, {pipeline_mode = #tpu.pipeline_mode<synchronous>, transform_indices = @transform_3, window_bounds = array<i64: 16, 32>}, {pipeline_mode = #tpu.pipeline_mode<synchronous>, transform_indices = @transform_4, window_bounds = array<i64: 1, 32>}, {pipeline_mode = #tpu.pipeline_mode<synchronous>, transform_indices = @transform_5, window_bounds = array<i64: 32, 1>}, {transform_indices = @transform_6, window_bounds = array<i64: 1, 1>}, {transform_indices = @transform_7, window_bounds = array<i64: 8, 96>}]} {
    %c0 = arith.constant 0 : index
    %c0_0 = arith.constant 0 : index
    %0 = vector.load %arg5[%c0, %c0_0] : memref<16x32xf32, #tpu.memory_space<vmem>>, vector<16x32xf32>
    %c0_1 = arith.constant 0 : index
    %c0_2 = arith.constant 0 : index
    %1 = vector.load %arg6[%c0_1, %c0_2] : memref<1x32xf32, #tpu.memory_space<vmem>>, vector<1x32xf32>
    %c0_3 = arith.constant 0 : index
    %c0_4 = arith.constant 0 : index
    %2 = vector.load %arg7[%c0_3, %c0_4] : memref<32x1xf32, #tpu.memory_space<vmem>>, vector<32x1xf32>
    %c0_5 = arith.constant 0 : index
    %c0_6 = arith.constant 0 : index
    %3 = memref.load %arg8[%c0_5, %c0_6] : memref<1x1xf32, #tpu.memory_space<smem>>
    %c0_i32 = arith.constant 0 : i32
    %4 = arith.cmpi eq, %arg1, %c0_i32 : i32
    %5 = arith.extui %4 : i1 to i32
    %c0_i32_7 = arith.constant 0 : i32
    %6 = arith.cmpi ne, %5, %c0_i32_7 : i32
    scf.if %6 {
      %c0_71 = arith.constant 0 : index
      %c0_72 = arith.constant 0 : index
      %150 = vector.load %arg4[%c0_71, %c0_72] : memref<8x16xf32, #tpu.memory_space<vmem>>, vector<8x16xf32>
      %c0_73 = arith.constant 0 : index
      %c0_74 = arith.constant 0 : index
      %151 = vector.load %arg10[%c0_73, %c0_74] : memref<8x16xf32, #tpu.memory_space<vmem>>, vector<8x16xf32>
      tpu.vector_store %arg10[%c0_73, %c0_74], %150 {strides = array<i32>} : memref<8x16xf32, #tpu.memory_space<vmem>>, vector<8x16xf32>,
      %c0_75 = arith.constant 0 : index
      %c0_76 = arith.constant 0 : index
      %152 = vector.load %arg4[%c0_75, %c0_76] : memref<8x16xf32, #tpu.memory_space<vmem>>, vector<8x16xf32>
      %cst_77 = arith.constant dense<0.000000e+00> : vector<8x32xf32>
      %153 = tpu.matmul %152, %0, %cst_77 {dimension_numbers = #tpu.dot_dimension_numbers<[1], [0], [0], [1], [0, 0, 1, 1], [], []>} : vector<8x16xf32>, vector<16x32xf32>, vector<8x32xf32> -> vector<8x32xf32>
      %154 = vector.broadcast %1 : vector<1x32xf32> to vector<8x32xf32>
      %155 = arith.addf %153, %154 : vector<8x32xf32>
      %156 = math.tanh %155 : vector<8x32xf32>
      %cst_78 = arith.constant dense<0.000000e+00> : vector<8x1xf32>
      %157 = tpu.matmul %156, %2, %cst_78 {dimension_numbers = #tpu.dot_dimension_numbers<[1], [0], [0], [1], [0, 0, 1, 1], [], []>} : vector<8x32xf32>, vector<32x1xf32>, vector<8x1xf32> -> vector<8x1xf32>
      %158 = vector.broadcast %3 : f32 to vector<8x1xf32>
      %159 = arith.addf %157, %158 : vector<8x1xf32>
      %c0_79 = arith.constant 0 : index
      %c0_80 = arith.constant 0 : index
      %160 = vector.load %arg11[%c0_79, %c0_80] : memref<8x1xf32, #tpu.memory_space<vmem>>, vector<8x1xf32>
      tpu.vector_store %arg11[%c0_79, %c0_80], %159 {strides = array<i32>} : memref<8x1xf32, #tpu.memory_space<vmem>>, vector<8x1xf32>,
    } else {
    }
    %7 = tpu.iota {dimensions = array<i32: 1>} : vector<8x16xi32>
    %c0_8 = arith.constant 0 : index
    %c0_9 = arith.constant 0 : index
    %8 = vector.load %arg10[%c0_8, %c0_9] : memref<8x16xf32, #tpu.memory_space<vmem>>, vector<8x16xf32>
    %c0_10 = arith.constant 0 : index
    %c0_11 = arith.constant 0 : index
    %9 = vector.load %arg11[%c0_10, %c0_11] : memref<8x1xf32, #tpu.memory_space<vmem>>, vector<8x1xf32>
    %c0_12 = arith.constant 0 : index
    %c0_13 = arith.constant 0 : index
    %c0_14 = arith.constant 0 : index
    %10 = vector.load %arg2[%c0_12, %c0_13, %c0_14] : memref<6x8x1xi32, #tpu.memory_space<vmem>>, vector<1x8x1xi32>
    %11 = vector.shape_cast %10 : vector<1x8x1xi32> to vector<8x1xi32>
    %12 = vector.broadcast %11 : vector<8x1xi32> to vector<8x16xi32>
    %13 = arith.cmpi eq, %7, %12 : vector<8x16xi32>
    %cst = arith.constant 0.000000e+00 : f32
    %14 = vector.broadcast %cst : f32 to vector<8x16xf32>
    %15 = arith.subf %14, %8 : vector<8x16xf32>
    %16 = arith.select %13, %15, %8 : vector<8x16xi1>, vector<8x16xf32>
    %cst_15 = arith.constant dense<0.000000e+00> : vector<8x32xf32>
    %17 = tpu.matmul %16, %0, %cst_15 {dimension_numbers = #tpu.dot_dimension_numbers<[1], [0], [0], [1], [0, 0, 1, 1], [], []>} : vector<8x16xf32>, vector<16x32xf32>, vector<8x32xf32> -> vector<8x32xf32>
    %18 = vector.broadcast %1 : vector<1x32xf32> to vector<8x32xf32>
    %19 = arith.addf %17, %18 : vector<8x32xf32>
    %20 = math.tanh %19 : vector<8x32xf32>
    %cst_16 = arith.constant dense<0.000000e+00> : vector<8x1xf32>
    %21 = tpu.matmul %20, %2, %cst_16 {dimension_numbers = #tpu.dot_dimension_numbers<[1], [0], [0], [1], [0, 0, 1, 1], [], []>} : vector<8x32xf32>, vector<32x1xf32>, vector<8x1xf32> -> vector<8x1xf32>
    %22 = vector.broadcast %3 : f32 to vector<8x1xf32>
    %23 = arith.addf %21, %22 : vector<8x1xf32>
    %c0_17 = arith.constant 0 : index
    %c0_18 = arith.constant 0 : index
    %c0_19 = arith.constant 0 : index
    %24 = vector.load %arg3[%c0_17, %c0_18, %c0_19] : memref<6x8x1xf32, #tpu.memory_space<vmem>>, vector<1x8x1xf32>
    %25 = vector.shape_cast %24 : vector<1x8x1xf32> to vector<8x1xf32>
    %26 = arith.subf %23, %9 : vector<8x1xf32>
    %27 = arith.cmpf olt, %25, %26 : vector<8x1xf32>
    %28 = vector.shape_cast %27 : vector<8x1xi1> to vector<8x1xi1>
    %29 = vector.broadcast %28 : vector<8x1xi1> to vector<8x16xi1>
    %30 = arith.select %29, %16, %8 : vector<8x16xi1>, vector<8x16xf32>
    %31 = arith.select %27, %23, %9 : vector<8x1xi1>, vector<8x1xf32>
    %c0_20 = arith.constant 0 : index
    %c0_21 = arith.constant 0 : index
    %32 = vector.load %arg9[%c0_20, %c0_21] : memref<8x96xf32, #tpu.memory_space<vmem>>, vector<8x16xf32>
    tpu.vector_store %arg9[%c0_20, %c0_21], %30 {strides = array<i32>} : memref<8x96xf32, #tpu.memory_space<vmem>>, vector<8x16xf32>,
    %c1 = arith.constant 1 : index
    %c0_22 = arith.constant 0 : index
    %c0_23 = arith.constant 0 : index
    %33 = vector.load %arg2[%c1, %c0_22, %c0_23] : memref<6x8x1xi32, #tpu.memory_space<vmem>>, vector<1x8x1xi32>
    %34 = vector.shape_cast %33 : vector<1x8x1xi32> to vector<8x1xi32>
    %35 = vector.broadcast %34 : vector<8x1xi32> to vector<8x16xi32>
    %36 = arith.cmpi eq, %7, %35 : vector<8x16xi32>
    %cst_24 = arith.constant 0.000000e+00 : f32
    %37 = vector.broadcast %cst_24 : f32 to vector<8x16xf32>
    %38 = arith.subf %37, %30 : vector<8x16xf32>
    %39 = arith.select %36, %38, %30 : vector<8x16xi1>, vector<8x16xf32>
    %cst_25 = arith.constant dense<0.000000e+00> : vector<8x32xf32>
    %40 = tpu.matmul %39, %0, %cst_25 {dimension_numbers = #tpu.dot_dimension_numbers<[1], [0], [0], [1], [0, 0, 1, 1], [], []>} : vector<8x16xf32>, vector<16x32xf32>, vector<8x32xf32> -> vector<8x32xf32>
    %41 = vector.broadcast %1 : vector<1x32xf32> to vector<8x32xf32>
    %42 = arith.addf %40, %41 : vector<8x32xf32>
    %43 = math.tanh %42 : vector<8x32xf32>
    %cst_26 = arith.constant dense<0.000000e+00> : vector<8x1xf32>
    %44 = tpu.matmul %43, %2, %cst_26 {dimension_numbers = #tpu.dot_dimension_numbers<[1], [0], [0], [1], [0, 0, 1, 1], [], []>} : vector<8x32xf32>, vector<32x1xf32>, vector<8x1xf32> -> vector<8x1xf32>
    %45 = vector.broadcast %3 : f32 to vector<8x1xf32>
    %46 = arith.addf %44, %45 : vector<8x1xf32>
    %c1_27 = arith.constant 1 : index
    %c0_28 = arith.constant 0 : index
    %c0_29 = arith.constant 0 : index
    %47 = vector.load %arg3[%c1_27, %c0_28, %c0_29] : memref<6x8x1xf32, #tpu.memory_space<vmem>>, vector<1x8x1xf32>
    %48 = vector.shape_cast %47 : vector<1x8x1xf32> to vector<8x1xf32>
    %49 = arith.subf %46, %31 : vector<8x1xf32>
    %50 = arith.cmpf olt, %48, %49 : vector<8x1xf32>
    %51 = vector.shape_cast %50 : vector<8x1xi1> to vector<8x1xi1>
    %52 = vector.broadcast %51 : vector<8x1xi1> to vector<8x16xi1>
    %53 = arith.select %52, %39, %30 : vector<8x16xi1>, vector<8x16xf32>
    %54 = arith.select %50, %46, %31 : vector<8x1xi1>, vector<8x1xf32>
    %c0_30 = arith.constant 0 : index
    %c16 = arith.constant 16 : index
    %55 = vector.load %arg9[%c0_30, %c16] : memref<8x96xf32, #tpu.memory_space<vmem>>, vector<8x16xf32>
    tpu.vector_store %arg9[%c0_30, %c16], %53 {strides = array<i32>} : memref<8x96xf32, #tpu.memory_space<vmem>>, vector<8x16xf32>,
    %c2 = arith.constant 2 : index
    %c0_31 = arith.constant 0 : index
    %c0_32 = arith.constant 0 : index
    %56 = vector.load %arg2[%c2, %c0_31, %c0_32] : memref<6x8x1xi32, #tpu.memory_space<vmem>>, vector<1x8x1xi32>
    %57 = vector.shape_cast %56 : vector<1x8x1xi32> to vector<8x1xi32>
    %58 = vector.broadcast %57 : vector<8x1xi32> to vector<8x16xi32>
    %59 = arith.cmpi eq, %7, %58 : vector<8x16xi32>
    %cst_33 = arith.constant 0.000000e+00 : f32
    %60 = vector.broadcast %cst_33 : f32 to vector<8x16xf32>
    %61 = arith.subf %60, %53 : vector<8x16xf32>
    %62 = arith.select %59, %61, %53 : vector<8x16xi1>, vector<8x16xf32>
    %cst_34 = arith.constant dense<0.000000e+00> : vector<8x32xf32>
    %63 = tpu.matmul %62, %0, %cst_34 {dimension_numbers = #tpu.dot_dimension_numbers<[1], [0], [0], [1], [0, 0, 1, 1], [], []>} : vector<8x16xf32>, vector<16x32xf32>, vector<8x32xf32> -> vector<8x32xf32>
    %64 = vector.broadcast %1 : vector<1x32xf32> to vector<8x32xf32>
    %65 = arith.addf %63, %64 : vector<8x32xf32>
    %66 = math.tanh %65 : vector<8x32xf32>
    %cst_35 = arith.constant dense<0.000000e+00> : vector<8x1xf32>
    %67 = tpu.matmul %66, %2, %cst_35 {dimension_numbers = #tpu.dot_dimension_numbers<[1], [0], [0], [1], [0, 0, 1, 1], [], []>} : vector<8x32xf32>, vector<32x1xf32>, vector<8x1xf32> -> vector<8x1xf32>
    %68 = vector.broadcast %3 : f32 to vector<8x1xf32>
    %69 = arith.addf %67, %68 : vector<8x1xf32>
    %c2_36 = arith.constant 2 : index
    %c0_37 = arith.constant 0 : index
    %c0_38 = arith.constant 0 : index
    %70 = vector.load %arg3[%c2_36, %c0_37, %c0_38] : memref<6x8x1xf32, #tpu.memory_space<vmem>>, vector<1x8x1xf32>
    %71 = vector.shape_cast %70 : vector<1x8x1xf32> to vector<8x1xf32>
    %72 = arith.subf %69, %54 : vector<8x1xf32>
    %73 = arith.cmpf olt, %71, %72 : vector<8x1xf32>
    %74 = vector.shape_cast %73 : vector<8x1xi1> to vector<8x1xi1>
    %75 = vector.broadcast %74 : vector<8x1xi1> to vector<8x16xi1>
    %76 = arith.select %75, %62, %53 : vector<8x16xi1>, vector<8x16xf32>
    %77 = arith.select %73, %69, %54 : vector<8x1xi1>, vector<8x1xf32>
    %c0_39 = arith.constant 0 : index
    %c32 = arith.constant 32 : index
    %78 = vector.load %arg9[%c0_39, %c32] : memref<8x96xf32, #tpu.memory_space<vmem>>, vector<8x16xf32>
    tpu.vector_store %arg9[%c0_39, %c32], %76 {strides = array<i32>} : memref<8x96xf32, #tpu.memory_space<vmem>>, vector<8x16xf32>,
    %c3 = arith.constant 3 : index
    %c0_40 = arith.constant 0 : index
    %c0_41 = arith.constant 0 : index
    %79 = vector.load %arg2[%c3, %c0_40, %c0_41] : memref<6x8x1xi32, #tpu.memory_space<vmem>>, vector<1x8x1xi32>
    %80 = vector.shape_cast %79 : vector<1x8x1xi32> to vector<8x1xi32>
    %81 = vector.broadcast %80 : vector<8x1xi32> to vector<8x16xi32>
    %82 = arith.cmpi eq, %7, %81 : vector<8x16xi32>
    %cst_42 = arith.constant 0.000000e+00 : f32
    %83 = vector.broadcast %cst_42 : f32 to vector<8x16xf32>
    %84 = arith.subf %83, %76 : vector<8x16xf32>
    %85 = arith.select %82, %84, %76 : vector<8x16xi1>, vector<8x16xf32>
    %cst_43 = arith.constant dense<0.000000e+00> : vector<8x32xf32>
    %86 = tpu.matmul %85, %0, %cst_43 {dimension_numbers = #tpu.dot_dimension_numbers<[1], [0], [0], [1], [0, 0, 1, 1], [], []>} : vector<8x16xf32>, vector<16x32xf32>, vector<8x32xf32> -> vector<8x32xf32>
    %87 = vector.broadcast %1 : vector<1x32xf32> to vector<8x32xf32>
    %88 = arith.addf %86, %87 : vector<8x32xf32>
    %89 = math.tanh %88 : vector<8x32xf32>
    %cst_44 = arith.constant dense<0.000000e+00> : vector<8x1xf32>
    %90 = tpu.matmul %89, %2, %cst_44 {dimension_numbers = #tpu.dot_dimension_numbers<[1], [0], [0], [1], [0, 0, 1, 1], [], []>} : vector<8x32xf32>, vector<32x1xf32>, vector<8x1xf32> -> vector<8x1xf32>
    %91 = vector.broadcast %3 : f32 to vector<8x1xf32>
    %92 = arith.addf %90, %91 : vector<8x1xf32>
    %c3_45 = arith.constant 3 : index
    %c0_46 = arith.constant 0 : index
    %c0_47 = arith.constant 0 : index
    %93 = vector.load %arg3[%c3_45, %c0_46, %c0_47] : memref<6x8x1xf32, #tpu.memory_space<vmem>>, vector<1x8x1xf32>
    %94 = vector.shape_cast %93 : vector<1x8x1xf32> to vector<8x1xf32>
    %95 = arith.subf %92, %77 : vector<8x1xf32>
    %96 = arith.cmpf olt, %94, %95 : vector<8x1xf32>
    %97 = vector.shape_cast %96 : vector<8x1xi1> to vector<8x1xi1>
    %98 = vector.broadcast %97 : vector<8x1xi1> to vector<8x16xi1>
    %99 = arith.select %98, %85, %76 : vector<8x16xi1>, vector<8x16xf32>
    %100 = arith.select %96, %92, %77 : vector<8x1xi1>, vector<8x1xf32>
    %c0_48 = arith.constant 0 : index
    %c48 = arith.constant 48 : index
    %101 = vector.load %arg9[%c0_48, %c48] : memref<8x96xf32, #tpu.memory_space<vmem>>, vector<8x16xf32>
    tpu.vector_store %arg9[%c0_48, %c48], %99 {strides = array<i32>} : memref<8x96xf32, #tpu.memory_space<vmem>>, vector<8x16xf32>,
    %c4 = arith.constant 4 : index
    %c0_49 = arith.constant 0 : index
    %c0_50 = arith.constant 0 : index
    %102 = vector.load %arg2[%c4, %c0_49, %c0_50] : memref<6x8x1xi32, #tpu.memory_space<vmem>>, vector<1x8x1xi32>
    %103 = vector.shape_cast %102 : vector<1x8x1xi32> to vector<8x1xi32>
    %104 = vector.broadcast %103 : vector<8x1xi32> to vector<8x16xi32>
    %105 = arith.cmpi eq, %7, %104 : vector<8x16xi32>
    %cst_51 = arith.constant 0.000000e+00 : f32
    %106 = vector.broadcast %cst_51 : f32 to vector<8x16xf32>
    %107 = arith.subf %106, %99 : vector<8x16xf32>
    %108 = arith.select %105, %107, %99 : vector<8x16xi1>, vector<8x16xf32>
    %cst_52 = arith.constant dense<0.000000e+00> : vector<8x32xf32>
    %109 = tpu.matmul %108, %0, %cst_52 {dimension_numbers = #tpu.dot_dimension_numbers<[1], [0], [0], [1], [0, 0, 1, 1], [], []>} : vector<8x16xf32>, vector<16x32xf32>, vector<8x32xf32> -> vector<8x32xf32>
    %110 = vector.broadcast %1 : vector<1x32xf32> to vector<8x32xf32>
    %111 = arith.addf %109, %110 : vector<8x32xf32>
    %112 = math.tanh %111 : vector<8x32xf32>
    %cst_53 = arith.constant dense<0.000000e+00> : vector<8x1xf32>
    %113 = tpu.matmul %112, %2, %cst_53 {dimension_numbers = #tpu.dot_dimension_numbers<[1], [0], [0], [1], [0, 0, 1, 1], [], []>} : vector<8x32xf32>, vector<32x1xf32>, vector<8x1xf32> -> vector<8x1xf32>
    %114 = vector.broadcast %3 : f32 to vector<8x1xf32>
    %115 = arith.addf %113, %114 : vector<8x1xf32>
    %c4_54 = arith.constant 4 : index
    %c0_55 = arith.constant 0 : index
    %c0_56 = arith.constant 0 : index
    %116 = vector.load %arg3[%c4_54, %c0_55, %c0_56] : memref<6x8x1xf32, #tpu.memory_space<vmem>>, vector<1x8x1xf32>
    %117 = vector.shape_cast %116 : vector<1x8x1xf32> to vector<8x1xf32>
    %118 = arith.subf %115, %100 : vector<8x1xf32>
    %119 = arith.cmpf olt, %117, %118 : vector<8x1xf32>
    %120 = vector.shape_cast %119 : vector<8x1xi1> to vector<8x1xi1>
    %121 = vector.broadcast %120 : vector<8x1xi1> to vector<8x16xi1>
    %122 = arith.select %121, %108, %99 : vector<8x16xi1>, vector<8x16xf32>
    %123 = arith.select %119, %115, %100 : vector<8x1xi1>, vector<8x1xf32>
    %c0_57 = arith.constant 0 : index
    %c64 = arith.constant 64 : index
    %124 = vector.load %arg9[%c0_57, %c64] : memref<8x96xf32, #tpu.memory_space<vmem>>, vector<8x16xf32>
    tpu.vector_store %arg9[%c0_57, %c64], %122 {strides = array<i32>} : memref<8x96xf32, #tpu.memory_space<vmem>>, vector<8x16xf32>,
    %c5 = arith.constant 5 : index
    %c0_58 = arith.constant 0 : index
    %c0_59 = arith.constant 0 : index
    %125 = vector.load %arg2[%c5, %c0_58, %c0_59] : memref<6x8x1xi32, #tpu.memory_space<vmem>>, vector<1x8x1xi32>
    %126 = vector.shape_cast %125 : vector<1x8x1xi32> to vector<8x1xi32>
    %127 = vector.broadcast %126 : vector<8x1xi32> to vector<8x16xi32>
    %128 = arith.cmpi eq, %7, %127 : vector<8x16xi32>
    %cst_60 = arith.constant 0.000000e+00 : f32
    %129 = vector.broadcast %cst_60 : f32 to vector<8x16xf32>
    %130 = arith.subf %129, %122 : vector<8x16xf32>
    %131 = arith.select %128, %130, %122 : vector<8x16xi1>, vector<8x16xf32>
    %cst_61 = arith.constant dense<0.000000e+00> : vector<8x32xf32>
    %132 = tpu.matmul %131, %0, %cst_61 {dimension_numbers = #tpu.dot_dimension_numbers<[1], [0], [0], [1], [0, 0, 1, 1], [], []>} : vector<8x16xf32>, vector<16x32xf32>, vector<8x32xf32> -> vector<8x32xf32>
    %133 = vector.broadcast %1 : vector<1x32xf32> to vector<8x32xf32>
    %134 = arith.addf %132, %133 : vector<8x32xf32>
    %135 = math.tanh %134 : vector<8x32xf32>
    %cst_62 = arith.constant dense<0.000000e+00> : vector<8x1xf32>
    %136 = tpu.matmul %135, %2, %cst_62 {dimension_numbers = #tpu.dot_dimension_numbers<[1], [0], [0], [1], [0, 0, 1, 1], [], []>} : vector<8x32xf32>, vector<32x1xf32>, vector<8x1xf32> -> vector<8x1xf32>
    %137 = vector.broadcast %3 : f32 to vector<8x1xf32>
    %138 = arith.addf %136, %137 : vector<8x1xf32>
    %c5_63 = arith.constant 5 : index
    %c0_64 = arith.constant 0 : index
    %c0_65 = arith.constant 0 : index
    %139 = vector.load %arg3[%c5_63, %c0_64, %c0_65] : memref<6x8x1xf32, #tpu.memory_space<vmem>>, vector<1x8x1xf32>
    %140 = vector.shape_cast %139 : vector<1x8x1xf32> to vector<8x1xf32>
    %141 = arith.subf %138, %123 : vector<8x1xf32>
    %142 = arith.cmpf olt, %140, %141 : vector<8x1xf32>
    %143 = vector.shape_cast %142 : vector<8x1xi1> to vector<8x1xi1>
    %144 = vector.broadcast %143 : vector<8x1xi1> to vector<8x16xi1>
    %145 = arith.select %144, %131, %122 : vector<8x16xi1>, vector<8x16xf32>
    %146 = arith.select %142, %138, %123 : vector<8x1xi1>, vector<8x1xf32>
    %c0_66 = arith.constant 0 : index
    %c80 = arith.constant 80 : index
    %147 = vector.load %arg9[%c0_66, %c80] : memref<8x96xf32, #tpu.memory_space<vmem>>, vector<8x16xf32>
    tpu.vector_store %arg9[%c0_66, %c80], %145 {strides = array<i32>} : memref<8x96xf32, #tpu.memory_space<vmem>>, vector<8x16xf32>,
    %c0_67 = arith.constant 0 : index
    %c0_68 = arith.constant 0 : index
    %148 = vector.load %arg10[%c0_67, %c0_68] : memref<8x16xf32, #tpu.memory_space<vmem>>, vector<8x16xf32>
    tpu.vector_store %arg10[%c0_67, %c0_68], %145 {strides = array<i32>} : memref<8x16xf32, #tpu.memory_space<vmem>>, vector<8x16xf32>,
    %c0_69 = arith.constant 0 : index
    %c0_70 = arith.constant 0 : index
    %149 = vector.load %arg11[%c0_69, %c0_70] : memref<8x1xf32, #tpu.memory_space<vmem>>, vector<8x1xf32>
    tpu.vector_store %arg11[%c0_69, %c0_70], %146 {strides = array<i32>} : memref<8x1xf32, #tpu.memory_space<vmem>>, vector<8x1xf32>,
    return
  }
  func.func @transform_0(%arg0: i32, %arg1: i32) -> (i32, i32, i32) {
    %c0_i32 = arith.constant 0 : i32
    %c0_i32_0 = arith.constant 0 : i32
    return %arg1, %arg0, %c0_i32 : i32, i32, i32
  }
  func.func @transform_1(%arg0: i32, %arg1: i32) -> (i32, i32, i32) {
    %c0_i32 = arith.constant 0 : i32
    %c0_i32_0 = arith.constant 0 : i32
    return %arg1, %arg0, %c0_i32 : i32, i32, i32
  }
  func.func @transform_2(%arg0: i32, %arg1: i32) -> (i32, i32) {
    %c0_i32 = arith.constant 0 : i32
    %c0_i32_0 = arith.constant 0 : i32
    return %arg0, %c0_i32 : i32, i32
  }
  func.func @transform_3(%arg0: i32, %arg1: i32) -> (i32, i32) {
    %c0_i32 = arith.constant 0 : i32
    %c0_i32_0 = arith.constant 0 : i32
    %c0_i32_1 = arith.constant 0 : i32
    return %c0_i32, %c0_i32_0 : i32, i32
  }
  func.func @transform_4(%arg0: i32, %arg1: i32) -> (i32, i32) {
    %c0_i32 = arith.constant 0 : i32
    %c0_i32_0 = arith.constant 0 : i32
    %c0_i32_1 = arith.constant 0 : i32
    return %c0_i32, %c0_i32_0 : i32, i32
  }
  func.func @transform_5(%arg0: i32, %arg1: i32) -> (i32, i32) {
    %c0_i32 = arith.constant 0 : i32
    %c0_i32_0 = arith.constant 0 : i32
    %c0_i32_1 = arith.constant 0 : i32
    return %c0_i32, %c0_i32_0 : i32, i32
  }
  func.func @transform_6(%arg0: i32, %arg1: i32) -> (i32, i32) {
    %c0_i32 = arith.constant 0 : i32
    %c0_i32_0 = arith.constant 0 : i32
    %c0_i32_1 = arith.constant 0 : i32
    return %c0_i32, %c0_i32_0 : i32, i32
  }
  func.func @transform_7(%arg0: i32, %arg1: i32) -> (i32, i32) {
    %c0_i32 = arith.constant 0 : i32
    return %arg0, %arg1 : i32, i32
  }
}

</mosaic_0001>

<llo_original>
// kernel: tpu_custom_call.1
$region0: #{tpu_custom_call.1}
  #allocation0 [shape = 'u32[]', space=smem, size = 0x4, offset = 0x4, fixed_abs, tag = 'smem constant byte address 0x4 - core index']
  #allocation1 [shape = 'u32[144,128]{1,0:T(1,128)}', space=vmem, size = 0x12000, scoped, tag = 'internal scratch']
  #allocation2 [shape = 'f32[8,16]{1,0:T(8,128)}', space=vmem, size = 0x1000, scoped, tag = 'scratch operand']
  #allocation3 [shape = 'f32[8,1]{1,0:T(8,128)}', space=vmem, size = 0x1000, scoped, tag = 'scratch operand']
  #allocation4 [shape = 'f32[1,1]{1,0:T(1,128)S(6)}', space=smem, size = 0x200, scoped, tag = 'scoped memory for tpu_custom_call.1']
  %s0 = inlined_call_operand.vmem [shape: s32[6,8,1], index: 0, kind: input, shape index: {}]
  %s1 = inlined_call_operand.vmem [shape: f32[6,8,1], index: 1, kind: input, shape index: {}]
  %s2 = inlined_call_operand.vmem [shape: f32[8,16], index: 2, kind: input, shape index: {}]
  %s3 = inlined_call_operand.vmem [shape: f32[16,32], index: 3, kind: input, shape index: {}]
  %s4 = inlined_call_operand.vmem [shape: f32[1,32], index: 4, kind: input, shape index: {}]
  %s5 = inlined_call_operand.vmem [shape: f32[32,1], index: 5, kind: input, shape index: {}]
  %s6 = inlined_call_operand.<no memory space> [shape: f32[1,1], index: 6, kind: input, shape index: {}]
  %s7 = inlined_call_operand.hbm [shape: f32[8,96], index: 7, kind: output, shape index: {}]
  %s8 = sld [smem:[#allocation0]]
  $region42: #{tpu_custom_call.1} parent=0
    _
  %s10 = ssub.s32 1, %s8
  %s11 = scalar_select 0, %s10, %s8
  %12 = sst [smem:[#allocation4]] %s6
  $region1: #{tpu_custom_call.1} parent=0
    #allocation5 [shape = 'u8[4096]{0}', space=vmem, size = 0x1000, scoped, tag = 'output window, operand 0, single buffered']
    #allocation6 [shape = 's32[1]{0}', space=sflag, size = 0x4, scoped, tag = 'scoped memory for tpu_custom_call.1']
    %13 = vsyncpa [#allocation6], 0
    // Predicated region
    $region2: #{tpu_custom_call.1} parent=1 // pred_check
      _
    $region3: #{tpu_custom_call.1} parent=1 // pred_check_branch
      %15 = sbr.rel (0) target = $region5
    $region4: #{tpu_custom_call.1} parent=1 // pred_region
      _
    $region5: #{tpu_custom_call.1} parent=1 // pred_fallthru
      _
    // Predicated region
    $region6: #{tpu_custom_call.1} parent=1 // pred_check
      _
    $region7: #{tpu_custom_call.1} parent=1 // pred_check_branch
      %17 = sbr.rel (0) target = $region9
    $region8: #{tpu_custom_call.1} parent=1 // pred_region
      _
    $region9: #{tpu_custom_call.1} parent=1 // pred_fallthru
      _
    // Predicated region
    $region10: #{tpu_custom_call.1} parent=1 // pred_check
      _
    $region11: #{tpu_custom_call.1} parent=1 // pred_check_branch
      %19 = sbr.rel (0) target = $region13
    $region12: #{tpu_custom_call.1} parent=1 // pred_region
      _
    $region13: #{tpu_custom_call.1} parent=1 // pred_fallthru
      _
    // Predicated region
    $region14: #{tpu_custom_call.1} parent=1 // pred_check
      _
    $region15: #{tpu_custom_call.1} parent=1 // pred_check_branch
      %21 = sbr.rel (0) target = $region17
    $region16: #{tpu_custom_call.1} parent=1 // pred_region
      _
    $region17: #{tpu_custom_call.1} parent=1 // pred_fallthru
      _
    // Predicated region
    $region18: #{tpu_custom_call.1} parent=1 // pred_check
      _
    $region19: #{tpu_custom_call.1} parent=1 // pred_check_branch
      %23 = sbr.rel (0) target = $region21
    $region20: #{tpu_custom_call.1} parent=1 // pred_region
      _
    $region21: #{tpu_custom_call.1} parent=1 // pred_fallthru
      _
    // Predicated region
    $region22: #{tpu_custom_call.1} parent=1 // pred_check
      _
    $region23: #{tpu_custom_call.1} parent=1 // pred_check_branch
      %25 = sbr.rel (0) target = $region25
    $region24: #{tpu_custom_call.1} parent=1 // pred_region
      _
    $region25: #{tpu_custom_call.1} parent=1 // pred_fallthru
      _
    // Predicated region
    $region26: #{tpu_custom_call.1} parent=1 // pred_check
      _
    $region27: #{tpu_custom_call.1} parent=1 // pred_check_branch
      %27 = sbr.rel (0) target = $region29
    $region28: #{tpu_custom_call.1} parent=1 // pred_region
      _
    $region29: #{tpu_custom_call.1} parent=1 // pred_fallthru
      _
    %v28 = vld [vmem:[%s3] sm:$0xff]
    %v29 = vld [vmem:[%s3 + $0x8] sm:$0xff]
    %v30 = vld [vmem:[%s4] sm:$0x1]
    %v31 = vld [vmem:[%s5] sm:$0xff]
    %v32 = vld [vmem:[%s5 + $0x8] sm:$0xff]
    %v33 = vld [vmem:[%s5 + $0x10] sm:$0xff]
    %v34 = vld [vmem:[%s5 + $0x18] sm:$0xff]
    %s35 = sld [smem:[#allocation4]]
    %p36 = scmp.eq.s32.totalorder 0, 0
    // Predicated region
    $region30: #{tpu_custom_call.1} parent=1 // pred_check
      %p37 = pneg %p36
    $region31: #{tpu_custom_call.1} parent=1 // pred_check_branch
      %39 = sbr.rel (%p37) target = $region33
    $region32: #{tpu_custom_call.1} parent=1 // pred_region
      %v40 = vld [vmem:[%s2] sm:$0xff]
      %vm41 = vcmask 130048
      %42 = vst.msk [vmem:[#allocation2] sm:$0xff] %vm41, %v40
      %v43 = vld [vmem:[%s2] sm:$0xff]
      %v45 = vlaneseq
      %v46 = vshrl.u32 %v45, 7
      %v47 = vsub.s32 0, %v46
      %v48 = vrot.slane %v30, %v47
      %v51 = vsel %vm41, %v43, 0
      %53 = vmatprep.subr.mxu0 0.0
      %54 = vmatpush1.msra.mxu0 %v28
      %55 = vmatprep.subr.mxu0 0.0
      %56 = vmatpush1.msra.mxu0 %v29
      %57 = vmatprep.subr.mxu0 0.0
      %58 = vmatpush1.msra.mxu0 0.0
      %59 = vmatprep.subr.mxu0 0.0
      %60 = vmatpush1.msra.mxu0 0.0
      %61 = vmatprep.subr.mxu0 0.0
      %62 = vmatpush1.msra.mxu0 0.0
      %63 = vmatprep.subr.mxu0 0.0
      %64 = vmatpush1.msra.mxu0 0.0
      %65 = vmatprep.subr.mxu0 0.0
      %66 = vmatpush1.msra.mxu0 0.0
      %67 = vmatprep.subr.mxu0 0.0
      %68 = vmatpush1.msra.mxu0 0.0
      %69 = vmatprep.subr.mxu0 0.0
      %70 = vmatpush1.msra.mxu0 0.0
      %71 = vmatprep.subr.mxu0 0.0
      %72 = vmatpush1.msra.mxu0 0.0
      %73 = vmatprep.subr.mxu0 0.0
      %74 = vmatpush1.msra.mxu0 0.0
      %75 = vmatprep.subr.mxu0 0.0
      %76 = vmatpush1.msra.mxu0 0.0
      %77 = vmatprep.subr.mxu0 0.0
      %78 = vmatpush1.msra.mxu0 0.0
      %79 = vmatprep.subr.mxu0 0.0
      %80 = vmatpush1.msra.mxu0 0.0
      %81 = vmatprep.subr.mxu0 0.0
      %82 = vmatpush1.msra.mxu0 0.0
      %83 = vmatprep.subr.mxu0 0.0
      %84 = vmatpush1.msra.mxu0 0.0
      %85 = vmatprep.subr.mxu0 0.0
      %86 = vmatpush1.msra.mxu0 0.0
      %87 = vmatprep.subr.mxu0 0.0
      %88 = vmatpush1.msra.mxu0 0.0
      %89 = vmatprep.subr.mxu0 0.0
      %90 = vmatpush1.msra.mxu0 0.0
      %91 = vmatprep.subr.mxu0 0.0
      %92 = vmatpush1.msra.mxu0 0.0
      %93 = vmatprep.subr.mxu0 0.0
      %94 = vmatpush1.msra.mxu0 0.0
      %95 = vmatprep.subr.mxu0 0.0
      %96 = vmatpush1.msra.mxu0 0.0
      %97 = vmatprep.subr.mxu0 0.0
      %98 = vmatpush1.msra.mxu0 0.0
      %99 = vmatprep.subr.mxu0 0.0
      %100 = vmatpush1.msra.mxu0 0.0
      %101 = vmatprep.subr.mxu0 0.0
      %102 = vmatpush1.msra.mxu0 0.0
      %103 = vmatprep.subr.mxu0 0.0
      %104 = vmatpush1.msra.mxu0 0.0
      %105 = vmatprep.subr.mxu0 0.0
      %106 = vmatpush1.msra.mxu0 0.0
      %107 = vmatprep.subr.mxu0 0.0
      %108 = vmatpush1.msra.mxu0 0.0
      %109 = vmatprep.subr.mxu0 0.0
      %110 = vmatpush1.msra.mxu0 0.0
      %111 = vmatprep.subr.mxu0 0.0
      %112 = vmatpush1.msra.mxu0 0.0
      %113 = vmatprep.subr.mxu0 0.0
      %114 = vmatpush1.msra.mxu0 0.0
      %115 = vmatprep.subr.mxu0 0.0
      %116 = vmatpush1.msra.mxu0 0.0
      %117 = vmatprep.mubr.f32.mxu0 0.0
      %118 = vmatmul.mubr.f32.gmra.mrb[0].mxu0 %v51
      %v119 = vpop.f32.mrb[0].mxu0
      %v120 = vadd.f32 %v48, %v119
      %v121 = vpop.f32.mrb[0].mxu0
      %122 = vdwg.mxu0
      %v123 = vtanh.pop %v120
      %v124 = vstv %s35
      %vm125 = vcmask 261120
      %v127 = vsel %vm125, %v123, 0
      %129 = vmatprep.subr.mxu0 0.0
      %130 = vmatpush1.msra.mxu0 %v31
      %131 = vmatprep.subr.mxu0 0.0
      %132 = vmatpush1.msra.mxu0 %v32
      %133 = vmatprep.subr.mxu0 0.0
      %134 = vmatpush1.msra.mxu0 %v33
      %135 = vmatprep.subr.mxu0 0.0
      %136 = vmatpush1.msra.mxu0 %v34
      %137 = vmatprep.subr.mxu0 0.0
      %138 = vmatpush1.msra.mxu0 0.0
      %139 = vmatprep.subr.mxu0 0.0
      %140 = vmatpush1.msra.mxu0 0.0
      %141 = vmatprep.subr.mxu0 0.0
      %142 = vmatpush1.msra.mxu0 0.0
      %143 = vmatprep.subr.mxu0 0.0
      %144 = vmatpush1.msra.mxu0 0.0
      %145 = vmatprep.subr.mxu0 0.0
      %146 = vmatpush1.msra.mxu0 0.0
      %147 = vmatprep.subr.mxu0 0.0
      %148 = vmatpush1.msra.mxu0 0.0
      %149 = vmatprep.subr.mxu0 0.0
      %150 = vmatpush1.msra.mxu0 0.0
      %151 = vmatprep.subr.mxu0 0.0
      %152 = vmatpush1.msra.mxu0 0.0
      %153 = vmatprep.subr.mxu0 0.0
      %154 = vmatpush1.msra.mxu0 0.0
      %155 = vmatprep.subr.mxu0 0.0
      %156 = vmatpush1.msra.mxu0 0.0
      %157 = vmatprep.subr.mxu0 0.0
      %158 = vmatpush1.msra.mxu0 0.0
      %159 = vmatprep.subr.mxu0 0.0
      %160 = vmatpush1.msra.mxu0 0.0
      %161 = vmatprep.subr.mxu0 0.0
      %162 = vmatpush1.msra.mxu0 0.0
      %163 = vmatprep.subr.mxu0 0.0
      %164 = vmatpush1.msra.mxu0 0.0
      %165 = vmatprep.subr.mxu0 0.0
      %166 = vmatpush1.msra.mxu0 0.0
      %167 = vmatprep.subr.mxu0 0.0
      %168 = vmatpush1.msra.mxu0 0.0
      %169 = vmatprep.subr.mxu0 0.0
      %170 = vmatpush1.msra.mxu0 0.0
      %171 = vmatprep.subr.mxu0 0.0
      %172 = vmatpush1.msra.mxu0 0.0
      %173 = vmatprep.subr.mxu0 0.0
      %174 = vmatpush1.msra.mxu0 0.0
      %175 = vmatprep.subr.mxu0 0.0
      %176 = vmatpush1.msra.mxu0 0.0
      %177 = vmatprep.subr.mxu0 0.0
      %178 = vmatpush1.msra.mxu0 0.0
      %179 = vmatprep.subr.mxu0 0.0
      %180 = vmatpush1.msra.mxu0 0.0
      %181 = vmatprep.subr.mxu0 0.0
      %182 = vmatpush1.msra.mxu0 0.0
      %183 = vmatprep.subr.mxu0 0.0
      %184 = vmatpush1.msra.mxu0 0.0
      %185 = vmatprep.subr.mxu0 0.0
      %186 = vmatpush1.msra.mxu0 0.0
      %187 = vmatprep.subr.mxu0 0.0
      %188 = vmatpush1.msra.mxu0 0.0
      %189 = vmatprep.subr.mxu0 0.0
      %190 = vmatpush1.msra.mxu0 0.0
      %191 = vmatprep.subr.mxu0 0.0
      %192 = vmatpush1.msra.mxu0 0.0
      %193 = vmatprep.mubr.f32.mxu0 0.0
      %194 = vmatmul.mubr.f32.gmra.mrb[0].mxu0 %v127
      %v195 = vpop.f32.mrb[0].mxu0
      %v196 = vadd.f32 %v124, %v195
      %v197 = vpop.f32.mrb[0].mxu0
      %198 = vdwg.mxu0
      %vm199 = vcmask 7168
      %200 = vst.msk [vmem:[#allocation3] sm:$0xff] %vm199, %v196
    $region33: #{tpu_custom_call.1} parent=1 // pred_fallthru
      _
    %v201 = vlaneseq
    %v202 = vand.u32 %v201, 127
    %v203 = vld [vmem:[#allocation2] sm:$0xff]
    %v204 = vld [vmem:[#allocation3] sm:$0xff]
    %v205 = vld [vmem:[%s0] sm:$0xff]
    %206 = vset.pattern.permute.xlu0 0
    %207 = vperm.xlu0 %206, %v205
    %v208 = vpop.permute.xlu0 %207
    %vm209 = vcmp.eq.s32.totalorder %v202, %v208
    %v210 = vsub.f32 0.0, %v203
    %v211 = vsel %vm209, %v210, %v203
    %v213 = vlaneseq
    %v214 = vshrl.u32 %v213, 7
    %v215 = vsub.s32 0, %v214
    %v216 = vrot.slane %v30, %v215
    %vm218 = vcmask 130048
    %v220 = vsel %vm218, %v211, 0
    %222 = vmatprep.subr.mxu0 0.0
    %223 = vmatpush1.msra.mxu0 %v28
    %224 = vmatprep.subr.mxu0 0.0
    %225 = vmatpush1.msra.mxu0 %v29
    %226 = vmatprep.subr.mxu0 0.0
    %227 = vmatpush1.msra.mxu0 0.0
    %228 = vmatprep.subr.mxu0 0.0
    %229 = vmatpush1.msra.mxu0 0.0
    %230 = vmatprep.subr.mxu0 0.0
    %231 = vmatpush1.msra.mxu0 0.0
    %232 = vmatprep.subr.mxu0 0.0
    %233 = vmatpush1.msra.mxu0 0.0
    %234 = vmatprep.subr.mxu0 0.0
    %235 = vmatpush1.msra.mxu0 0.0
    %236 = vmatprep.subr.mxu0 0.0
    %237 = vmatpush1.msra.mxu0 0.0
    %238 = vmatprep.subr.mxu0 0.0
    %239 = vmatpush1.msra.mxu0 0.0
    %240 = vmatprep.subr.mxu0 0.0
    %241 = vmatpush1.msra.mxu0 0.0
    %242 = vmatprep.subr.mxu0 0.0
    %243 = vmatpush1.msra.mxu0 0.0
    %244 = vmatprep.subr.mxu0 0.0
    %245 = vmatpush1.msra.mxu0 0.0
    %246 = vmatprep.subr.mxu0 0.0
    %247 = vmatpush1.msra.mxu0 0.0
    %248 = vmatprep.subr.mxu0 0.0
    %249 = vmatpush1.msra.mxu0 0.0
    %250 = vmatprep.subr.mxu0 0.0
    %251 = vmatpush1.msra.mxu0 0.0
    %252 = vmatprep.subr.mxu0 0.0
    %253 = vmatpush1.msra.mxu0 0.0
    %254 = vmatprep.subr.mxu0 0.0
    %255 = vmatpush1.msra.mxu0 0.0
    %256 = vmatprep.subr.mxu0 0.0
    %257 = vmatpush1.msra.mxu0 0.0
    %258 = vmatprep.subr.mxu0 0.0
    %259 = vmatpush1.msra.mxu0 0.0
    %260 = vmatprep.subr.mxu0 0.0
    %261 = vmatpush1.msra.mxu0 0.0
    %262 = vmatprep.subr.mxu0 0.0
    %263 = vmatpush1.msra.mxu0 0.0
    %264 = vmatprep.subr.mxu0 0.0
    %265 = vmatpush1.msra.mxu0 0.0
    %266 = vmatprep.subr.mxu0 0.0
    %267 = vmatpush1.msra.mxu0 0.0
    %268 = vmatprep.subr.mxu0 0.0
    %269 = vmatpush1.msra.mxu0 0.0
    %270 = vmatprep.subr.mxu0 0.0
    %271 = vmatpush1.msra.mxu0 0.0
    %272 = vmatprep.subr.mxu0 0.0
    %273 = vmatpush1.msra.mxu0 0.0
    %274 = vmatprep.subr.mxu0 0.0
    %275 = vmatpush1.msra.mxu0 0.0
    %276 = vmatprep.subr.mxu0 0.0
    %277 = vmatpush1.msra.mxu0 0.0
    %278 = vmatprep.subr.mxu0 0.0
    %279 = vmatpush1.msra.mxu0 0.0
    %280 = vmatprep.subr.mxu0 0.0
    %281 = vmatpush1.msra.mxu0 0.0
    %282 = vmatprep.subr.mxu0 0.0
    %283 = vmatpush1.msra.mxu0 0.0
    %284 = vmatprep.subr.mxu0 0.0
    %285 = vmatpush1.msra.mxu0 0.0
    %286 = vmatprep.mubr.f32.mxu0 0.0
    %287 = vmatmul.mubr.f32.gmra.mrb[0].mxu0 %v220
    %v288 = vpop.f32.mrb[0].mxu0
    %v289 = vadd.f32 %v216, %v288
    %v290 = vpop.f32.mrb[0].mxu0
    %291 = vdwg.mxu0
    %v292 = vtanh.pop %v289
    %v293 = vstv %s35
    %vm294 = vcmask 261120
    %v296 = vsel %vm294, %v292, 0
    %298 = vmatprep.subr.mxu0 0.0
    %299 = vmatpush1.msra.mxu0 %v31
    %300 = vmatprep.subr.mxu0 0.0
    %301 = vmatpush1.msra.mxu0 %v32
    %302 = vmatprep.subr.mxu0 0.0
    %303 = vmatpush1.msra.mxu0 %v33
    %304 = vmatprep.subr.mxu0 0.0
    %305 = vmatpush1.msra.mxu0 %v34
    %306 = vmatprep.subr.mxu0 0.0
    %307 = vmatpush1.msra.mxu0 0.0
    %308 = vmatprep.subr.mxu0 0.0
    %309 = vmatpush1.msra.mxu0 0.0
    %310 = vmatprep.subr.mxu0 0.0
    %311 = vmatpush1.msra.mxu0 0.0
    %312 = vmatprep.subr.mxu0 0.0
    %313 = vmatpush1.msra.mxu0 0.0
    %314 = vmatprep.subr.mxu0 0.0
    %315 = vmatpush1.msra.mxu0 0.0
    %316 = vmatprep.subr.mxu0 0.0
    %317 = vmatpush1.msra.mxu0 0.0
    %318 = vmatprep.subr.mxu0 0.0
    %319 = vmatpush1.msra.mxu0 0.0
    %320 = vmatprep.subr.mxu0 0.0
    %321 = vmatpush1.msra.mxu0 0.0
    %322 = vmatprep.subr.mxu0 0.0
    %323 = vmatpush1.msra.mxu0 0.0
    %324 = vmatprep.subr.mxu0 0.0
    %325 = vmatpush1.msra.mxu0 0.0
    %326 = vmatprep.subr.mxu0 0.0
    %327 = vmatpush1.msra.mxu0 0.0
    %328 = vmatprep.subr.mxu0 0.0
    %329 = vmatpush1.msra.mxu0 0.0
    %330 = vmatprep.subr.mxu0 0.0
    %331 = vmatpush1.msra.mxu0 0.0
    %332 = vmatprep.subr.mxu0 0.0
    %333 = vmatpush1.msra.mxu0 0.0
    %334 = vmatprep.subr.mxu0 0.0
    %335 = vmatpush1.msra.mxu0 0.0
    %336 = vmatprep.subr.mxu0 0.0
    %337 = vmatpush1.msra.mxu0 0.0
    %338 = vmatprep.subr.mxu0 0.0
    %339 = vmatpush1.msra.mxu0 0.0
    %340 = vmatprep.subr.mxu0 0.0
    %341 = vmatpush1.msra.mxu0 0.0
    %342 = vmatprep.subr.mxu0 0.0
    %343 = vmatpush1.msra.mxu0 0.0
    %344 = vmatprep.subr.mxu0 0.0
    %345 = vmatpush1.msra.mxu0 0.0
    %346 = vmatprep.subr.mxu0 0.0
    %347 = vmatpush1.msra.mxu0 0.0
    %348 = vmatprep.subr.mxu0 0.0
    %349 = vmatpush1.msra.mxu0 0.0
    %350 = vmatprep.subr.mxu0 0.0
    %351 = vmatpush1.msra.mxu0 0.0
    %352 = vmatprep.subr.mxu0 0.0
    %353 = vmatpush1.msra.mxu0 0.0
    %354 = vmatprep.subr.mxu0 0.0
    %355 = vmatpush1.msra.mxu0 0.0
    %356 = vmatprep.subr.mxu0 0.0
    %357 = vmatpush1.msra.mxu0 0.0
    %358 = vmatprep.subr.mxu0 0.0
    %359 = vmatpush1.msra.mxu0 0.0
    %360 = vmatprep.subr.mxu0 0.0
    %361 = vmatpush1.msra.mxu0 0.0
    %362 = vmatprep.mubr.f32.mxu0 0.0
    %363 = vmatmul.mubr.f32.gmra.mrb[0].mxu0 %v296
    %v364 = vpop.f32.mrb[0].mxu0
    %v365 = vadd.f32 %v293, %v364
    %v366 = vpop.f32.mrb[0].mxu0
    %367 = vdwg.mxu0
    %v368 = vld [vmem:[%s1] sm:$0xff]
    %v369 = vsub.f32 %v365, %v204
    %vm370 = vcmp.lt.f32.partialorder %v368, %v369
    %v371 = vsel %vm370, 1, 0
    %372 = vset.pattern.permute.xlu0 0
    %373 = vperm.xlu0 %372, %v371
    %v374 = vpop.permute.xlu0 %373
    %vm375 = vcmp.eq.s32.totalorder %v374, 1
    %v376 = vsel %vm375, %v211, %v203
    %v377 = vsel %vm370, %v365, %v204
    %378 = vst.msk [vmem:[#allocation5] sm:$0xff] %vm218, %v376
    %s379 = scalar_lea.vmem %s0, 8
    %v380 = vld [vmem:[%s379] sm:$0xff]
    %381 = vset.pattern.permute.xlu0 0
    %382 = vperm.xlu0 %381, %v380
    %v383 = vpop.permute.xlu0 %382
    %vm384 = vcmp.eq.s32.totalorder %v202, %v383
    %v385 = vsub.f32 0.0, %v376
    %v386 = vsel %vm384, %v385, %v376
    %v388 = vsel %vm218, %v386, 0
    %390 = vmatprep.subr.mxu0 0.0
    %391 = vmatpush1.msra.mxu0 %v28
    %392 = vmatprep.subr.mxu0 0.0
    %393 = vmatpush1.msra.mxu0 %v29
    %394 = vmatprep.subr.mxu0 0.0
    %395 = vmatpush1.msra.mxu0 0.0
    %396 = vmatprep.subr.mxu0 0.0
    %397 = vmatpush1.msra.mxu0 0.0
    %398 = vmatprep.subr.mxu0 0.0
    %399 = vmatpush1.msra.mxu0 0.0
    %400 = vmatprep.subr.mxu0 0.0
    %401 = vmatpush1.msra.mxu0 0.0
    %402 = vmatprep.subr.mxu0 0.0
    %403 = vmatpush1.msra.mxu0 0.0
    %404 = vmatprep.subr.mxu0 0.0
    %405 = vmatpush1.msra.mxu0 0.0
    %406 = vmatprep.subr.mxu0 0.0
    %407 = vmatpush1.msra.mxu0 0.0
    %408 = vmatprep.subr.mxu0 0.0
    %409 = vmatpush1.msra.mxu0 0.0
    %410 = vmatprep.subr.mxu0 0.0
    %411 = vmatpush1.msra.mxu0 0.0
    %412 = vmatprep.subr.mxu0 0.0
    %413 = vmatpush1.msra.mxu0 0.0
    %414 = vmatprep.subr.mxu0 0.0
    %415 = vmatpush1.msra.mxu0 0.0
    %416 = vmatprep.subr.mxu0 0.0
    %417 = vmatpush1.msra.mxu0 0.0
    %418 = vmatprep.subr.mxu0 0.0
    %419 = vmatpush1.msra.mxu0 0.0
    %420 = vmatprep.subr.mxu0 0.0
    %421 = vmatpush1.msra.mxu0 0.0
    %422 = vmatprep.subr.mxu0 0.0
    %423 = vmatpush1.msra.mxu0 0.0
    %424 = vmatprep.subr.mxu0 0.0
    %425 = vmatpush1.msra.mxu0 0.0
    %426 = vmatprep.subr.mxu0 0.0
    %427 = vmatpush1.msra.mxu0 0.0
    %428 = vmatprep.subr.mxu0 0.0
    %429 = vmatpush1.msra.mxu0 0.0
    %430 = vmatprep.subr.mxu0 0.0
    %431 = vmatpush1.msra.mxu0 0.0
    %432 = vmatprep.subr.mxu0 0.0
    %433 = vmatpush1.msra.mxu0 0.0
    %434 = vmatprep.subr.mxu0 0.0
    %435 = vmatpush1.msra.mxu0 0.0
    %436 = vmatprep.subr.mxu0 0.0
    %437 = vmatpush1.msra.mxu0 0.0
    %438 = vmatprep.subr.mxu0 0.0
    %439 = vmatpush1.msra.mxu0 0.0
    %440 = vmatprep.subr.mxu0 0.0
    %441 = vmatpush1.msra.mxu0 0.0
    %442 = vmatprep.subr.mxu0 0.0
    %443 = vmatpush1.msra.mxu0 0.0
    %444 = vmatprep.subr.mxu0 0.0
    %445 = vmatpush1.msra.mxu0 0.0
    %446 = vmatprep.subr.mxu0 0.0
    %447 = vmatpush1.msra.mxu0 0.0
    %448 = vmatprep.subr.mxu0 0.0
    %449 = vmatpush1.msra.mxu0 0.0
    %450 = vmatprep.subr.mxu0 0.0
    %451 = vmatpush1.msra.mxu0 0.0
    %452 = vmatprep.subr.mxu0 0.0
    %453 = vmatpush1.msra.mxu0 0.0
    %454 = vmatprep.mubr.f32.mxu0 0.0
    %455 = vmatmul.mubr.f32.gmra.mrb[0].mxu0 %v388
    %v456 = vpop.f32.mrb[0].mxu0
    %v457 = vadd.f32 %v216, %v456
    %v458 = vpop.f32.mrb[0].mxu0
    %459 = vdwg.mxu0
    %v460 = vtanh.pop %v457
    %v462 = vsel %vm294, %v460, 0
    %464 = vmatprep.subr.mxu0 0.0
    %465 = vmatpush1.msra.mxu0 %v31
    %466 = vmatprep.subr.mxu0 0.0
    %467 = vmatpush1.msra.mxu0 %v32
    %468 = vmatprep.subr.mxu0 0.0
    %469 = vmatpush1.msra.mxu0 %v33
    %470 = vmatprep.subr.mxu0 0.0
    %471 = vmatpush1.msra.mxu0 %v34
    %472 = vmatprep.subr.mxu0 0.0
    %473 = vmatpush1.msra.mxu0 0.0
    %474 = vmatprep.subr.mxu0 0.0
    %475 = vmatpush1.msra.mxu0 0.0
    %476 = vmatprep.subr.mxu0 0.0
    %477 = vmatpush1.msra.mxu0 0.0
    %478 = vmatprep.subr.mxu0 0.0
    %479 = vmatpush1.msra.mxu0 0.0
    %480 = vmatprep.subr.mxu0 0.0
    %481 = vmatpush1.msra.mxu0 0.0
    %482 = vmatprep.subr.mxu0 0.0
    %483 = vmatpush1.msra.mxu0 0.0
    %484 = vmatprep.subr.mxu0 0.0
    %485 = vmatpush1.msra.mxu0 0.0
    %486 = vmatprep.subr.mxu0 0.0
    %487 = vmatpush1.msra.mxu0 0.0
    %488 = vmatprep.subr.mxu0 0.0
    %489 = vmatpush1.msra.mxu0 0.0
    %490 = vmatprep.subr.mxu0 0.0
    %491 = vmatpush1.msra.mxu0 0.0
    %492 = vmatprep.subr.mxu0 0.0
    %493 = vmatpush1.msra.mxu0 0.0
    %494 = vmatprep.subr.mxu0 0.0
    %495 = vmatpush1.msra.mxu0 0.0
    %496 = vmatprep.subr.mxu0 0.0
    %497 = vmatpush1.msra.mxu0 0.0
    %498 = vmatprep.subr.mxu0 0.0
    %499 = vmatpush1.msra.mxu0 0.0
    %500 = vmatprep.subr.mxu0 0.0
    %501 = vmatpush1.msra.mxu0 0.0
    %502 = vmatprep.subr.mxu0 0.0
    %503 = vmatpush1.msra.mxu0 0.0
    %504 = vmatprep.subr.mxu0 0.0
    %505 = vmatpush1.msra.mxu0 0.0
    %506 = vmatprep.subr.mxu0 0.0
    %507 = vmatpush1.msra.mxu0 0.0
    %508 = vmatprep.subr.mxu0 0.0
    %509 = vmatpush1.msra.mxu0 0.0
    %510 = vmatprep.subr.mxu0 0.0
    %511 = vmatpush1.msra.mxu0 0.0
    %512 = vmatprep.subr.mxu0 0.0
    %513 = vmatpush1.msra.mxu0 0.0
    %514 = vmatprep.subr.mxu0 0.0
    %515 = vmatpush1.msra.mxu0 0.0
    %516 = vmatprep.subr.mxu0 0.0
    %517 = vmatpush1.msra.mxu0 0.0
    %518 = vmatprep.subr.mxu0 0.0
    %519 = vmatpush1.msra.mxu0 0.0
    %520 = vmatprep.subr.mxu0 0.0
    %521 = vmatpush1.msra.mxu0 0.0
    %522 = vmatprep.subr.mxu0 0.0
    %523 = vmatpush1.msra.mxu0 0.0
    %524 = vmatprep.subr.mxu0 0.0
    %525 = vmatpush1.msra.mxu0 0.0
    %526 = vmatprep.subr.mxu0 0.0
    %527 = vmatpush1.msra.mxu0 0.0
    %528 = vmatprep.mubr.f32.mxu0 0.0
    %529 = vmatmul.mubr.f32.gmra.mrb[0].mxu0 %v462
    %v530 = vpop.f32.mrb[0].mxu0
    %v531 = vadd.f32 %v293, %v530
    %v532 = vpop.f32.mrb[0].mxu0
    %533 = vdwg.mxu0
    %s534 = scalar_lea.vmem %s1, 8
    %v535 = vld [vmem:[%s534] sm:$0xff]
    %v536 = vsub.f32 %v531, %v377
    %vm537 = vcmp.lt.f32.partialorder %v535, %v536
    %v538 = vsel %vm537, 1, 0
    %539 = vset.pattern.permute.xlu0 0
    %540 = vperm.xlu0 %539, %v538
    %v541 = vpop.permute.xlu0 %540
    %vm542 = vcmp.eq.s32.totalorder %v541, 1
    %v543 = vsel %vm542, %v386, %v376
    %v544 = vsel %vm537, %v531, %v377
    %546 = vrot.lane.b32.xlu0 %v543, 16
    %v547 = vpop.permute.xlu0 %546
    %vm549 = vcmask 261248
    %550 = vst.msk [vmem:[#allocation5] sm:$0xff] %vm549, %v547
    %s551 = scalar_lea.vmem %s0, 16
    %v552 = vld [vmem:[%s551] sm:$0xff]
    %553 = vset.pattern.permute.xlu0 0
    %554 = vperm.xlu0 %553, %v552
    %v555 = vpop.permute.xlu0 %554
    %vm556 = vcmp.eq.s32.totalorder %v202, %v555
    %v557 = vsub.f32 0.0, %v543
    %v558 = vsel %vm556, %v557, %v543
    %v560 = vsel %vm218, %v558, 0
    %562 = vmatprep.subr.mxu0 0.0
    %563 = vmatpush1.msra.mxu0 %v28
    %564 = vmatprep.subr.mxu0 0.0
    %565 = vmatpush1.msra.mxu0 %v29
    %566 = vmatprep.subr.mxu0 0.0
    %567 = vmatpush1.msra.mxu0 0.0
    %568 = vmatprep.subr.mxu0 0.0
    %569 = vmatpush1.msra.mxu0 0.0
    %570 = vmatprep.subr.mxu0 0.0
    %571 = vmatpush1.msra.mxu0 0.0
    %572 = vmatprep.subr.mxu0 0.0
    %573 = vmatpush1.msra.mxu0 0.0
    %574 = vmatprep.subr.mxu0 0.0
    %575 = vmatpush1.msra.mxu0 0.0
    %576 = vmatprep.subr.mxu0 0.0
    %577 = vmatpush1.msra.mxu0 0.0
    %578 = vmatprep.subr.mxu0 0.0
    %579 = vmatpush1.msra.mxu0 0.0
    %580 = vmatprep.subr.mxu0 0.0
    %581 = vmatpush1.msra.mxu0 0.0
    %582 = vmatprep.subr.mxu0 0.0
    %583 = vmatpush1.msra.mxu0 0.0
    %584 = vmatprep.subr.mxu0 0.0
    %585 = vmatpush1.msra.mxu0 0.0
    %586 = vmatprep.subr.mxu0 0.0
    %587 = vmatpush1.msra.mxu0 0.0
    %588 = vmatprep.subr.mxu0 0.0
    %589 = vmatpush1.msra.mxu0 0.0
    %590 = vmatprep.subr.mxu0 0.0
    %591 = vmatpush1.msra.mxu0 0.0
    %592 = vmatprep.subr.mxu0 0.0
    %593 = vmatpush1.msra.mxu0 0.0
    %594 = vmatprep.subr.mxu0 0.0
    %595 = vmatpush1.msra.mxu0 0.0
    %596 = vmatprep.subr.mxu0 0.0
    %597 = vmatpush1.msra.mxu0 0.0
    %598 = vmatprep.subr.mxu0 0.0
    %599 = vmatpush1.msra.mxu0 0.0
    %600 = vmatprep.subr.mxu0 0.0
    %601 = vmatpush1.msra.mxu0 0.0
    %602 = vmatprep.subr.mxu0 0.0
    %603 = vmatpush1.msra.mxu0 0.0
    %604 = vmatprep.subr.mxu0 0.0
    %605 = vmatpush1.msra.mxu0 0.0
    %606 = vmatprep.subr.mxu0 0.0
    %607 = vmatpush1.msra.mxu0 0.0
    %608 = vmatprep.subr.mxu0 0.0
    %609 = vmatpush1.msra.mxu0 0.0
    %610 = vmatprep.subr.mxu0 0.0
    %611 = vmatpush1.msra.mxu0 0.0
    %612 = vmatprep.subr.mxu0 0.0
    %613 = vmatpush1.msra.mxu0 0.0
    %614 = vmatprep.subr.mxu0 0.0
    %615 = vmatpush1.msra.mxu0 0.0
    %616 = vmatprep.subr.mxu0 0.0
    %617 = vmatpush1.msra.mxu0 0.0
    %618 = vmatprep.subr.mxu0 0.0
    %619 = vmatpush1.msra.mxu0 0.0
    %620 = vmatprep.subr.mxu0 0.0
    %621 = vmatpush1.msra.mxu0 0.0
    %622 = vmatprep.subr.mxu0 0.0
    %623 = vmatpush1.msra.mxu0 0.0
    %624 = vmatprep.subr.mxu0 0.0
    %625 = vmatpush1.msra.mxu0 0.0
    %626 = vmatprep.mubr.f32.mxu0 0.0
    %627 = vmatmul.mubr.f32.gmra.mrb[0].mxu0 %v560
    %v628 = vpop.f32.mrb[0].mxu0
    %v629 = vadd.f32 %v216, %v628
    %v630 = vpop.f32.mrb[0].mxu0
    %631 = vdwg.mxu0
    %v632 = vtanh.pop %v629
    %v634 = vsel %vm294, %v632, 0
    %636 = vmatprep.subr.mxu0 0.0
    %637 = vmatpush1.msra.mxu0 %v31
    %638 = vmatprep.subr.mxu0 0.0
    %639 = vmatpush1.msra.mxu0 %v32
    %640 = vmatprep.subr.mxu0 0.0
    %641 = vmatpush1.msra.mxu0 %v33
    %642 = vmatprep.subr.mxu0 0.0
    %643 = vmatpush1.msra.mxu0 %v34
    %644 = vmatprep.subr.mxu0 0.0
    %645 = vmatpush1.msra.mxu0 0.0
    %646 = vmatprep.subr.mxu0 0.0
    %647 = vmatpush1.msra.mxu0 0.0
    %648 = vmatprep.subr.mxu0 0.0
    %649 = vmatpush1.msra.mxu0 0.0
    %650 = vmatprep.subr.mxu0 0.0
    %651 = vmatpush1.msra.mxu0 0.0
    %652 = vmatprep.subr.mxu0 0.0
    %653 = vmatpush1.msra.mxu0 0.0
    %654 = vmatprep.subr.mxu0 0.0
    %655 = vmatpush1.msra.mxu0 0.0
    %656 = vmatprep.subr.mxu0 0.0
    %657 = vmatpush1.msra.mxu0 0.0
    %658 = vmatprep.subr.mxu0 0.0
    %659 = vmatpush1.msra.mxu0 0.0
    %660 = vmatprep.subr.mxu0 0.0
    %661 = vmatpush1.msra.mxu0 0.0
    %662 = vmatprep.subr.mxu0 0.0
    %663 = vmatpush1.msra.mxu0 0.0
    %664 = vmatprep.subr.mxu0 0.0
    %665 = vmatpush1.msra.mxu0 0.0
    %666 = vmatprep.subr.mxu0 0.0
    %667 = vmatpush1.msra.mxu0 0.0
    %668 = vmatprep.subr.mxu0 0.0
    %669 = vmatpush1.msra.mxu0 0.0
    %670 = vmatprep.subr.mxu0 0.0
    %671 = vmatpush1.msra.mxu0 0.0
    %672 = vmatprep.subr.mxu0 0.0
    %673 = vmatpush1.msra.mxu0 0.0
    %674 = vmatprep.subr.mxu0 0.0
    %675 = vmatpush1.msra.mxu0 0.0
    %676 = vmatprep.subr.mxu0 0.0
    %677 = vmatpush1.msra.mxu0 0.0
    %678 = vmatprep.subr.mxu0 0.0
    %679 = vmatpush1.msra.mxu0 0.0
    %680 = vmatprep.subr.mxu0 0.0
    %681 = vmatpush1.msra.mxu0 0.0
    %682 = vmatprep.subr.mxu0 0.0
    %683 = vmatpush1.msra.mxu0 0.0
    %684 = vmatprep.subr.mxu0 0.0
    %685 = vmatpush1.msra.mxu0 0.0
    %686 = vmatprep.subr.mxu0 0.0
    %687 = vmatpush1.msra.mxu0 0.0
    %688 = vmatprep.subr.mxu0 0.0
    %689 = vmatpush1.msra.mxu0 0.0
    %690 = vmatprep.subr.mxu0 0.0
    %691 = vmatpush1.msra.mxu0 0.0
    %692 = vmatprep.subr.mxu0 0.0
    %693 = vmatpush1.msra.mxu0 0.0
    %694 = vmatprep.subr.mxu0 0.0
    %695 = vmatpush1.msra.mxu0 0.0
    %696 = vmatprep.subr.mxu0 0.0
    %697 = vmatpush1.msra.mxu0 0.0
    %698 = vmatprep.subr.mxu0 0.0
    %699 = vmatpush1.msra.mxu0 0.0
    %700 = vmatprep.mubr.f32.mxu0 0.0
    %701 = vmatmul.mubr.f32.gmra.mrb[0].mxu0 %v634
    %v702 = vpop.f32.mrb[0].mxu0
    %v703 = vadd.f32 %v293, %v702
    %v704 = vpop.f32.mrb[0].mxu0
    %705 = vdwg.mxu0
    %s706 = scalar_lea.vmem %s1, 16
    %v707 = vld [vmem:[%s706] sm:$0xff]
    %v708 = vsub.f32 %v703, %v544
    %vm709 = vcmp.lt.f32.partialorder %v707, %v708
    %v710 = vsel %vm709, 1, 0
    %711 = vset.pattern.permute.xlu0 0
    %712 = vperm.xlu0 %711, %v710
    %v713 = vpop.permute.xlu0 %712
    %vm714 = vcmp.eq.s32.totalorder %v713, 1
    %v715 = vsel %vm714, %v558, %v543
    %v716 = vsel %vm709, %v703, %v544
    %718 = vrot.lane.b32.xlu0 %v715, 32
    %v719 = vpop.permute.xlu0 %718
    %vm721 = vcmask 392448
    %722 = vst.msk [vmem:[#allocation5] sm:$0xff] %vm721, %v719
    %s723 = scalar_lea.vmem %s0, 24
    %v724 = vld [vmem:[%s723] sm:$0xff]
    %725 = vset.pattern.permute.xlu0 0
    %726 = vperm.xlu0 %725, %v724
    %v727 = vpop.permute.xlu0 %726
    %vm728 = vcmp.eq.s32.totalorder %v202, %v727
    %v729 = vsub.f32 0.0, %v715
    %v730 = vsel %vm728, %v729, %v715
    %v732 = vsel %vm218, %v730, 0
    %734 = vmatprep.subr.mxu0 0.0
    %735 = vmatpush1.msra.mxu0 %v28
    %736 = vmatprep.subr.mxu0 0.0
    %737 = vmatpush1.msra.mxu0 %v29
    %738 = vmatprep.subr.mxu0 0.0
    %739 = vmatpush1.msra.mxu0 0.0
    %740 = vmatprep.subr.mxu0 0.0
    %741 = vmatpush1.msra.mxu0 0.0
    %742 = vmatprep.subr.mxu0 0.0
    %743 = vmatpush1.msra.mxu0 0.0
    %744 = vmatprep.subr.mxu0 0.0
    %745 = vmatpush1.msra.mxu0 0.0
    %746 = vmatprep.subr.mxu0 0.0
    %747 = vmatpush1.msra.mxu0 0.0
    %748 = vmatprep.subr.mxu0 0.0
    %749 = vmatpush1.msra.mxu0 0.0
    %750 = vmatprep.subr.mxu0 0.0
    %751 = vmatpush1.msra.mxu0 0.0
    %752 = vmatprep.subr.mxu0 0.0
    %753 = vmatpush1.msra.mxu0 0.0
    %754 = vmatprep.subr.mxu0 0.0
    %755 = vmatpush1.msra.mxu0 0.0
    %756 = vmatprep.subr.mxu0 0.0
    %757 = vmatpush1.msra.mxu0 0.0
    %758 = vmatprep.subr.mxu0 0.0
    %759 = vmatpush1.msra.mxu0 0.0
    %760 = vmatprep.subr.mxu0 0.0
    %761 = vmatpush1.msra.mxu0 0.0
    %762 = vmatprep.subr.mxu0 0.0
    %763 = vmatpush1.msra.mxu0 0.0
    %764 = vmatprep.subr.mxu0 0.0
    %765 = vmatpush1.msra.mxu0 0.0
    %766 = vmatprep.subr.mxu0 0.0
    %767 = vmatpush1.msra.mxu0 0.0
    %768 = vmatprep.subr.mxu0 0.0
    %769 = vmatpush1.msra.mxu0 0.0
    %770 = vmatprep.subr.mxu0 0.0
    %771 = vmatpush1.msra.mxu0 0.0
    %772 = vmatprep.subr.mxu0 0.0
    %773 = vmatpush1.msra.mxu0 0.0
    %774 = vmatprep.subr.mxu0 0.0
    %775 = vmatpush1.msra.mxu0 0.0
    %776 = vmatprep.subr.mxu0 0.0
    %777 = vmatpush1.msra.mxu0 0.0
    %778 = vmatprep.subr.mxu0 0.0
    %779 = vmatpush1.msra.mxu0 0.0
    %780 = vmatprep.subr.mxu0 0.0
    %781 = vmatpush1.msra.mxu0 0.0
    %782 = vmatprep.subr.mxu0 0.0
    %783 = vmatpush1.msra.mxu0 0.0
    %784 = vmatprep.subr.mxu0 0.0
    %785 = vmatpush1.msra.mxu0 0.0
    %786 = vmatprep.subr.mxu0 0.0
    %787 = vmatpush1.msra.mxu0 0.0
    %788 = vmatprep.subr.mxu0 0.0
    %789 = vmatpush1.msra.mxu0 0.0
    %790 = vmatprep.subr.mxu0 0.0
    %791 = vmatpush1.msra.mxu0 0.0
    %792 = vmatprep.subr.mxu0 0.0
    %793 = vmatpush1.msra.mxu0 0.0
    %794 = vmatprep.subr.mxu0 0.0
    %795 = vmatpush1.msra.mxu0 0.0
    %796 = vmatprep.subr.mxu0 0.0
    %797 = vmatpush1.msra.mxu0 0.0
    %798 = vmatprep.mubr.f32.mxu0 0.0
    %799 = vmatmul.mubr.f32.gmra.mrb[0].mxu0 %v732
    %v800 = vpop.f32.mrb[0].mxu0
    %v801 = vadd.f32 %v216, %v800
    %v802 = vpop.f32.mrb[0].mxu0
    %803 = vdwg.mxu0
    %v804 = vtanh.pop %v801
    %v806 = vsel %vm294, %v804, 0
    %808 = vmatprep.subr.mxu0 0.0
    %809 = vmatpush1.msra.mxu0 %v31
    %810 = vmatprep.subr.mxu0 0.0
    %811 = vmatpush1.msra.mxu0 %v32
    %812 = vmatprep.subr.mxu0 0.0
    %813 = vmatpush1.msra.mxu0 %v33
    %814 = vmatprep.subr.mxu0 0.0
    %815 = vmatpush1.msra.mxu0 %v34
    %816 = vmatprep.subr.mxu0 0.0
    %817 = vmatpush1.msra.mxu0 0.0
    %818 = vmatprep.subr.mxu0 0.0
    %819 = vmatpush1.msra.mxu0 0.0
    %820 = vmatprep.subr.mxu0 0.0
    %821 = vmatpush1.msra.mxu0 0.0
    %822 = vmatprep.subr.mxu0 0.0
    %823 = vmatpush1.msra.mxu0 0.0
    %824 = vmatprep.subr.mxu0 0.0
    %825 = vmatpush1.msra.mxu0 0.0
    %826 = vmatprep.subr.mxu0 0.0
    %827 = vmatpush1.msra.mxu0 0.0
    %828 = vmatprep.subr.mxu0 0.0
    %829 = vmatpush1.msra.mxu0 0.0
    %830 = vmatprep.subr.mxu0 0.0
    %831 = vmatpush1.msra.mxu0 0.0
    %832 = vmatprep.subr.mxu0 0.0
    %833 = vmatpush1.msra.mxu0 0.0
    %834 = vmatprep.subr.mxu0 0.0
    %835 = vmatpush1.msra.mxu0 0.0
    %836 = vmatprep.subr.mxu0 0.0
    %837 = vmatpush1.msra.mxu0 0.0
    %838 = vmatprep.subr.mxu0 0.0
    %839 = vmatpush1.msra.mxu0 0.0
    %840 = vmatprep.subr.mxu0 0.0
    %841 = vmatpush1.msra.mxu0 0.0
    %842 = vmatprep.subr.mxu0 0.0
    %843 = vmatpush1.msra.mxu0 0.0
    %844 = vmatprep.subr.mxu0 0.0
    %845 = vmatpush1.msra.mxu0 0.0
    %846 = vmatprep.subr.mxu0 0.0
    %847 = vmatpush1.msra.mxu0 0.0
    %848 = vmatprep.subr.mxu0 0.0
    %849 = vmatpush1.msra.mxu0 0.0
    %850 = vmatprep.subr.mxu0 0.0
    %851 = vmatpush1.msra.mxu0 0.0
    %852 = vmatprep.subr.mxu0 0.0
    %853 = vmatpush1.msra.mxu0 0.0
    %854 = vmatprep.subr.mxu0 0.0
    %855 = vmatpush1.msra.mxu0 0.0
    %856 = vmatprep.subr.mxu0 0.0
    %857 = vmatpush1.msra.mxu0 0.0
    %858 = vmatprep.subr.mxu0 0.0
    %859 = vmatpush1.msra.mxu0 0.0
    %860 = vmatprep.subr.mxu0 0.0
    %861 = vmatpush1.msra.mxu0 0.0
    %862 = vmatprep.subr.mxu0 0.0
    %863 = vmatpush1.msra.mxu0 0.0
    %864 = vmatprep.subr.mxu0 0.0
    %865 = vmatpush1.msra.mxu0 0.0
    %866 = vmatprep.subr.mxu0 0.0
    %867 = vmatpush1.msra.mxu0 0.0
    %868 = vmatprep.subr.mxu0 0.0
    %869 = vmatpush1.msra.mxu0 0.0
    %870 = vmatprep.subr.mxu0 0.0
    %871 = vmatpush1.msra.mxu0 0.0
    %872 = vmatprep.mubr.f32.mxu0 0.0
    %873 = vmatmul.mubr.f32.gmra.mrb[0].mxu0 %v806
    %v874 = vpop.f32.mrb[0].mxu0
    %v875 = vadd.f32 %v293, %v874
    %v876 = vpop.f32.mrb[0].mxu0
    %877 = vdwg.mxu0
    %s878 = scalar_lea.vmem %s1, 24
    %v879 = vld [vmem:[%s878] sm:$0xff]
    %v880 = vsub.f32 %v875, %v716
    %vm881 = vcmp.lt.f32.partialorder %v879, %v880
    %v882 = vsel %vm881, 1, 0
    %883 = vset.pattern.permute.xlu0 0
    %884 = vperm.xlu0 %883, %v882
    %v885 = vpop.permute.xlu0 %884
    %vm886 = vcmp.eq.s32.totalorder %v885, 1
    %v887 = vsel %vm886, %v730, %v715
    %v888 = vsel %vm881, %v875, %v716
    %890 = vrot.lane.b32.xlu0 %v887, 48
    %v891 = vpop.permute.xlu0 %890
    %vm893 = vcmask 523648
    %894 = vst.msk [vmem:[#allocation5] sm:$0xff] %vm893, %v891
    %s895 = scalar_lea.vmem %s0, 32
    %v896 = vld [vmem:[%s895] sm:$0xff]
    %897 = vset.pattern.permute.xlu0 0
    %898 = vperm.xlu0 %897, %v896
    %v899 = vpop.permute.xlu0 %898
    %vm900 = vcmp.eq.s32.totalorder %v202, %v899
    %v901 = vsub.f32 0.0, %v887
    %v902 = vsel %vm900, %v901, %v887
    %v904 = vsel %vm218, %v902, 0
    %906 = vmatprep.subr.mxu0 0.0
    %907 = vmatpush1.msra.mxu0 %v28
    %908 = vmatprep.subr.mxu0 0.0
    %909 = vmatpush1.msra.mxu0 %v29
    %910 = vmatprep.subr.mxu0 0.0
    %911 = vmatpush1.msra.mxu0 0.0
    %912 = vmatprep.subr.mxu0 0.0
    %913 = vmatpush1.msra.mxu0 0.0
    %914 = vmatprep.subr.mxu0 0.0
    %915 = vmatpush1.msra.mxu0 0.0
    %916 = vmatprep.subr.mxu0 0.0
    %917 = vmatpush1.msra.mxu0 0.0
    %918 = vmatprep.subr.mxu0 0.0
    %919 = vmatpush1.msra.mxu0 0.0
    %920 = vmatprep.subr.mxu0 0.0
    %921 = vmatpush1.msra.mxu0 0.0
    %922 = vmatprep.subr.mxu0 0.0
    %923 = vmatpush1.msra.mxu0 0.0
    %924 = vmatprep.subr.mxu0 0.0
    %925 = vmatpush1.msra.mxu0 0.0
    %926 = vmatprep.subr.mxu0 0.0
    %927 = vmatpush1.msra.mxu0 0.0
    %928 = vmatprep.subr.mxu0 0.0
    %929 = vmatpush1.msra.mxu0 0.0
    %930 = vmatprep.subr.mxu0 0.0
    %931 = vmatpush1.msra.mxu0 0.0
    %932 = vmatprep.subr.mxu0 0.0
    %933 = vmatpush1.msra.mxu0 0.0
    %934 = vmatprep.subr.mxu0 0.0
    %935 = vmatpush1.msra.mxu0 0.0
    %936 = vmatprep.subr.mxu0 0.0
    %937 = vmatpush1.msra.mxu0 0.0
    %938 = vmatprep.subr.mxu0 0.0
    %939 = vmatpush1.msra.mxu0 0.0
    %940 = vmatprep.subr.mxu0 0.0
    %941 = vmatpush1.msra.mxu0 0.0
    %942 = vmatprep.subr.mxu0 0.0
    %943 = vmatpush1.msra.mxu0 0.0
    %944 = vmatprep.subr.mxu0 0.0
    %945 = vmatpush1.msra.mxu0 0.0
    %946 = vmatprep.subr.mxu0 0.0
    %947 = vmatpush1.msra.mxu0 0.0
    %948 = vmatprep.subr.mxu0 0.0
    %949 = vmatpush1.msra.mxu0 0.0
    %950 = vmatprep.subr.mxu0 0.0
    %951 = vmatpush1.msra.mxu0 0.0
    %952 = vmatprep.subr.mxu0 0.0
    %953 = vmatpush1.msra.mxu0 0.0
    %954 = vmatprep.subr.mxu0 0.0
    %955 = vmatpush1.msra.mxu0 0.0
    %956 = vmatprep.subr.mxu0 0.0
    %957 = vmatpush1.msra.mxu0 0.0
    %958 = vmatprep.subr.mxu0 0.0
    %959 = vmatpush1.msra.mxu0 0.0
    %960 = vmatprep.subr.mxu0 0.0
    %961 = vmatpush1.msra.mxu0 0.0
    %962 = vmatprep.subr.mxu0 0.0
    %963 = vmatpush1.msra.mxu0 0.0
    %964 = vmatprep.subr.mxu0 0.0
    %965 = vmatpush1.msra.mxu0 0.0
    %966 = vmatprep.subr.mxu0 0.0
    %967 = vmatpush1.msra.mxu0 0.0
    %968 = vmatprep.subr.mxu0 0.0
    %969 = vmatpush1.msra.mxu0 0.0
    %970 = vmatprep.mubr.f32.mxu0 0.0
    %971 = vmatmul.mubr.f32.gmra.mrb[0].mxu0 %v904
    %v972 = vpop.f32.mrb[0].mxu0
    %v973 = vadd.f32 %v216, %v972
    %v974 = vpop.f32.mrb[0].mxu0
    %975 = vdwg.mxu0
    %v976 = vtanh.pop %v973
    %v978 = vsel %vm294, %v976, 0
    %980 = vmatprep.subr.mxu0 0.0
    %981 = vmatpush1.msra.mxu0 %v31
    %982 = vmatprep.subr.mxu0 0.0
    %983 = vmatpush1.msra.mxu0 %v32
    %984 = vmatprep.subr.mxu0 0.0
    %985 = vmatpush1.msra.mxu0 %v33
    %986 = vmatprep.subr.mxu0 0.0
    %987 = vmatpush1.msra.mxu0 %v34
    %988 = vmatprep.subr.mxu0 0.0
    %989 = vmatpush1.msra.mxu0 0.0
    %990 = vmatprep.subr.mxu0 0.0
    %991 = vmatpush1.msra.mxu0 0.0
    %992 = vmatprep.subr.mxu0 0.0
    %993 = vmatpush1.msra.mxu0 0.0
    %994 = vmatprep.subr.mxu0 0.0
    %995 = vmatpush1.msra.mxu0 0.0
    %996 = vmatprep.subr.mxu0 0.0
    %997 = vmatpush1.msra.mxu0 0.0
    %998 = vmatprep.subr.mxu0 0.0
    %999 = vmatpush1.msra.mxu0 0.0
    %1000 = vmatprep.subr.mxu0 0.0
    %1001 = vmatpush1.msra.mxu0 0.0
    %1002 = vmatprep.subr.mxu0 0.0
    %1003 = vmatpush1.msra.mxu0 0.0
    %1004 = vmatprep.subr.mxu0 0.0
    %1005 = vmatpush1.msra.mxu0 0.0
    %1006 = vmatprep.subr.mxu0 0.0
    %1007 = vmatpush1.msra.mxu0 0.0
    %1008 = vmatprep.subr.mxu0 0.0
    %1009 = vmatpush1.msra.mxu0 0.0
    %1010 = vmatprep.subr.mxu0 0.0
    %1011 = vmatpush1.msra.mxu0 0.0
    %1012 = vmatprep.subr.mxu0 0.0
    %1013 = vmatpush1.msra.mxu0 0.0
    %1014 = vmatprep.subr.mxu0 0.0
    %1015 = vmatpush1.msra.mxu0 0.0
    %1016 = vmatprep.subr.mxu0 0.0
    %1017 = vmatpush1.msra.mxu0 0.0
    %1018 = vmatprep.subr.mxu0 0.0
    %1019 = vmatpush1.msra.mxu0 0.0
    %1020 = vmatprep.subr.mxu0 0.0
    %1021 = vmatpush1.msra.mxu0 0.0
    %1022 = vmatprep.subr.mxu0 0.0
    %1023 = vmatpush1.msra.mxu0 0.0
    %1024 = vmatprep.subr.mxu0 0.0
    %1025 = vmatpush1.msra.mxu0 0.0
    %1026 = vmatprep.subr.mxu0 0.0
    %1027 = vmatpush1.msra.mxu0 0.0
    %1028 = vmatprep.subr.mxu0 0.0
    %1029 = vmatpush1.msra.mxu0 0.0
    %1030 = vmatprep.subr.mxu0 0.0
    %1031 = vmatpush1.msra.mxu0 0.0
    %1032 = vmatprep.subr.mxu0 0.0
    %1033 = vmatpush1.msra.mxu0 0.0
    %1034 = vmatprep.subr.mxu0 0.0
    %1035 = vmatpush1.msra.mxu0 0.0
    %1036 = vmatprep.subr.mxu0 0.0
    %1037 = vmatpush1.msra.mxu0 0.0
    %1038 = vmatprep.subr.mxu0 0.0
    %1039 = vmatpush1.msra.mxu0 0.0
    %1040 = vmatprep.subr.mxu0 0.0
    %1041 = vmatpush1.msra.mxu0 0.0
    %1042 = vmatprep.subr.mxu0 0.0
    %1043 = vmatpush1.msra.mxu0 0.0
    %1044 = vmatprep.mubr.f32.mxu0 0.0
    %1045 = vmatmul.mubr.f32.gmra.mrb[0].mxu0 %v978
    %v1046 = vpop.f32.mrb[0].mxu0
    %v1047 = vadd.f32 %v293, %v1046
    %v1048 = vpop.f32.mrb[0].mxu0
    %1049 = vdwg.mxu0
    %s1050 = scalar_lea.vmem %s1, 32
    %v1051 = vld [vmem:[%s1050] sm:$0xff]
    %v1052 = vsub.f32 %v1047, %v888
    %vm1053 = vcmp.lt.f32.partialorder %v1051, %v1052
    %v1054 = vsel %vm1053, 1, 0
    %1055 = vset.pattern.permute.xlu0 0
    %1056 = vperm.xlu0 %1055, %v1054
    %v1057 = vpop.permute.xlu0 %1056
    %vm1058 = vcmp.eq.s32.totalorder %v1057, 1
    %v1059 = vsel %vm1058, %v902, %v887
    %v1060 = vsel %vm1053, %v1047, %v888
    %1062 = vrot.lane.b32.xlu0 %v1059, 64
    %v1063 = vpop.permute.xlu0 %1062
    %vm1065 = vcmask 654848
    %1066 = vst.msk [vmem:[#allocation5] sm:$0xff] %vm1065, %v1063
    %s1067 = scalar_lea.vmem %s0, 40
    %v1068 = vld [vmem:[%s1067] sm:$0xff]
    %1069 = vset.pattern.permute.xlu0 0
    %1070 = vperm.xlu0 %1069, %v1068
    %v1071 = vpop.permute.xlu0 %1070
    %vm1072 = vcmp.eq.s32.totalorder %v202, %v1071
    %v1073 = vsub.f32 0.0, %v1059
    %v1074 = vsel %vm1072, %v1073, %v1059
    %v1076 = vsel %vm218, %v1074, 0
    %1078 = vmatprep.subr.mxu0 0.0
    %1079 = vmatpush1.msra.mxu0 %v28
    %1080 = vmatprep.subr.mxu0 0.0
    %1081 = vmatpush1.msra.mxu0 %v29
    %1082 = vmatprep.subr.mxu0 0.0
    %1083 = vmatpush1.msra.mxu0 0.0
    %1084 = vmatprep.subr.mxu0 0.0
    %1085 = vmatpush1.msra.mxu0 0.0
    %1086 = vmatprep.subr.mxu0 0.0
    %1087 = vmatpush1.msra.mxu0 0.0
    %1088 = vmatprep.subr.mxu0 0.0
    %1089 = vmatpush1.msra.mxu0 0.0
    %1090 = vmatprep.subr.mxu0 0.0
    %1091 = vmatpush1.msra.mxu0 0.0
    %1092 = vmatprep.subr.mxu0 0.0
    %1093 = vmatpush1.msra.mxu0 0.0
    %1094 = vmatprep.subr.mxu0 0.0
    %1095 = vmatpush1.msra.mxu0 0.0
    %1096 = vmatprep.subr.mxu0 0.0
    %1097 = vmatpush1.msra.mxu0 0.0
    %1098 = vmatprep.subr.mxu0 0.0
    %1099 = vmatpush1.msra.mxu0 0.0
    %1100 = vmatprep.subr.mxu0 0.0
    %1101 = vmatpush1.msra.mxu0 0.0
    %1102 = vmatprep.subr.mxu0 0.0
    %1103 = vmatpush1.msra.mxu0 0.0
    %1104 = vmatprep.subr.mxu0 0.0
    %1105 = vmatpush1.msra.mxu0 0.0
    %1106 = vmatprep.subr.mxu0 0.0
    %1107 = vmatpush1.msra.mxu0 0.0
    %1108 = vmatprep.subr.mxu0 0.0
    %1109 = vmatpush1.msra.mxu0 0.0
    %1110 = vmatprep.subr.mxu0 0.0
    %1111 = vmatpush1.msra.mxu0 0.0
    %1112 = vmatprep.subr.mxu0 0.0
    %1113 = vmatpush1.msra.mxu0 0.0
    %1114 = vmatprep.subr.mxu0 0.0
    %1115 = vmatpush1.msra.mxu0 0.0
    %1116 = vmatprep.subr.mxu0 0.0
    %1117 = vmatpush1.msra.mxu0 0.0
    %1118 = vmatprep.subr.mxu0 0.0
    %1119 = vmatpush1.msra.mxu0 0.0
    %1120 = vmatprep.subr.mxu0 0.0
    %1121 = vmatpush1.msra.mxu0 0.0
    %1122 = vmatprep.subr.mxu0 0.0
    %1123 = vmatpush1.msra.mxu0 0.0
    %1124 = vmatprep.subr.mxu0 0.0
    %1125 = vmatpush1.msra.mxu0 0.0
    %1126 = vmatprep.subr.mxu0 0.0
    %1127 = vmatpush1.msra.mxu0 0.0
    %1128 = vmatprep.subr.mxu0 0.0
    %1129 = vmatpush1.msra.mxu0 0.0
    %1130 = vmatprep.subr.mxu0 0.0
    %1131 = vmatpush1.msra.mxu0 0.0
    %1132 = vmatprep.subr.mxu0 0.0
    %1133 = vmatpush1.msra.mxu0 0.0
    %1134 = vmatprep.subr.mxu0 0.0
    %1135 = vmatpush1.msra.mxu0 0.0
    %1136 = vmatprep.subr.mxu0 0.0
    %1137 = vmatpush1.msra.mxu0 0.0
    %1138 = vmatprep.subr.mxu0 0.0
    %1139 = vmatpush1.msra.mxu0 0.0
    %1140 = vmatprep.subr.mxu0 0.0
    %1141 = vmatpush1.msra.mxu0 0.0
    %1142 = vmatprep.mubr.f32.mxu0 0.0
    %1143 = vmatmul.mubr.f32.gmra.mrb[0].mxu0 %v1076
    %v1144 = vpop.f32.mrb[0].mxu0
    %v1145 = vadd.f32 %v216, %v1144
    %v1146 = vpop.f32.mrb[0].mxu0
    %1147 = vdwg.mxu0
    %v1148 = vtanh.pop %v1145
    %v1150 = vsel %vm294, %v1148, 0
    %1152 = vmatprep.subr.mxu0 0.0
    %1153 = vmatpush1.msra.mxu0 %v31
    %1154 = vmatprep.subr.mxu0 0.0
    %1155 = vmatpush1.msra.mxu0 %v32
    %1156 = vmatprep.subr.mxu0 0.0
    %1157 = vmatpush1.msra.mxu0 %v33
    %1158 = vmatprep.subr.mxu0 0.0
    %1159 = vmatpush1.msra.mxu0 %v34
    %1160 = vmatprep.subr.mxu0 0.0
    %1161 = vmatpush1.msra.mxu0 0.0
    %1162 = vmatprep.subr.mxu0 0.0
    %1163 = vmatpush1.msra.mxu0 0.0
    %1164 = vmatprep.subr.mxu0 0.0
    %1165 = vmatpush1.msra.mxu0 0.0
    %1166 = vmatprep.subr.mxu0 0.0
    %1167 = vmatpush1.msra.mxu0 0.0
    %1168 = vmatprep.subr.mxu0 0.0
    %1169 = vmatpush1.msra.mxu0 0.0
    %1170 = vmatprep.subr.mxu0 0.0
    %1171 = vmatpush1.msra.mxu0 0.0
    %1172 = vmatprep.subr.mxu0 0.0
    %1173 = vmatpush1.msra.mxu0 0.0
    %1174 = vmatprep.subr.mxu0 0.0
    %1175 = vmatpush1.msra.mxu0 0.0
    %1176 = vmatprep.subr.mxu0 0.0
    %1177 = vmatpush1.msra.mxu0 0.0
    %1178 = vmatprep.subr.mxu0 0.0
    %1179 = vmatpush1.msra.mxu0 0.0
    %1180 = vmatprep.subr.mxu0 0.0
    %1181 = vmatpush1.msra.mxu0 0.0
    %1182 = vmatprep.subr.mxu0 0.0
    %1183 = vmatpush1.msra.mxu0 0.0
    %1184 = vmatprep.subr.mxu0 0.0
    %1185 = vmatpush1.msra.mxu0 0.0
    %1186 = vmatprep.subr.mxu0 0.0
    %1187 = vmatpush1.msra.mxu0 0.0
    %1188 = vmatprep.subr.mxu0 0.0
    %1189 = vmatpush1.msra.mxu0 0.0
    %1190 = vmatprep.subr.mxu0 0.0
    %1191 = vmatpush1.msra.mxu0 0.0
    %1192 = vmatprep.subr.mxu0 0.0
    %1193 = vmatpush1.msra.mxu0 0.0
    %1194 = vmatprep.subr.mxu0 0.0
    %1195 = vmatpush1.msra.mxu0 0.0
    %1196 = vmatprep.subr.mxu0 0.0
    %1197 = vmatpush1.msra.mxu0 0.0
    %1198 = vmatprep.subr.mxu0 0.0
    %1199 = vmatpush1.msra.mxu0 0.0
    %1200 = vmatprep.subr.mxu0 0.0
    %1201 = vmatpush1.msra.mxu0 0.0
    %1202 = vmatprep.subr.mxu0 0.0
    %1203 = vmatpush1.msra.mxu0 0.0
    %1204 = vmatprep.subr.mxu0 0.0
    %1205 = vmatpush1.msra.mxu0 0.0
    %1206 = vmatprep.subr.mxu0 0.0
    %1207 = vmatpush1.msra.mxu0 0.0
    %1208 = vmatprep.subr.mxu0 0.0
    %1209 = vmatpush1.msra.mxu0 0.0
    %1210 = vmatprep.subr.mxu0 0.0
    %1211 = vmatpush1.msra.mxu0 0.0
    %1212 = vmatprep.subr.mxu0 0.0
    %1213 = vmatpush1.msra.mxu0 0.0
    %1214 = vmatprep.subr.mxu0 0.0
    %1215 = vmatpush1.msra.mxu0 0.0
    %1216 = vmatprep.mubr.f32.mxu0 0.0
    %1217 = vmatmul.mubr.f32.gmra.mrb[0].mxu0 %v1150
    %v1218 = vpop.f32.mrb[0].mxu0
    %v1219 = vadd.f32 %v293, %v1218
    %v1220 = vpop.f32.mrb[0].mxu0
    %1221 = vdwg.mxu0
    %s1222 = scalar_lea.vmem %s1, 40
    %v1223 = vld [vmem:[%s1222] sm:$0xff]
    %v1224 = vsub.f32 %v1219, %v1060
    %vm1225 = vcmp.lt.f32.partialorder %v1223, %v1224
    %v1226 = vsel %vm1225, 1, 0
    %1227 = vset.pattern.permute.xlu0 0
    %1228 = vperm.xlu0 %1227, %v1226
    %v1229 = vpop.permute.xlu0 %1228
    %vm1230 = vcmp.eq.s32.totalorder %v1229, 1
    %v1231 = vsel %vm1230, %v1074, %v1059
    %v1232 = vsel %vm1225, %v1219, %v1060
    %1234 = vrot.lane.b32.xlu0 %v1231, 80
    %v1235 = vpop.permute.xlu0 %1234
    %vm1237 = vcmask 786048
    %1238 = vst.msk [vmem:[#allocation5] sm:$0xff] %vm1237, %v1235
    %1239 = vst.msk [vmem:[#allocation2] sm:$0xff] %vm218, %v1231
    %vm1240 = vcmask 7168
    %1241 = vst.msk [vmem:[#allocation3] sm:$0xff] %vm1240, %v1232
    // Predicated region
    $region34: #{tpu_custom_call.1} parent=1 // pred_check
      _
    $region35: #{tpu_custom_call.1} parent=1 // pred_check_branch
      %1243 = sbr.rel (0) target = $region37
    $region36: #{tpu_custom_call.1} parent=1 // pred_region
      %s1245 = ssub.s32 128, 128
      %1246 = vsyncadd [#allocation6], %s1245
      %s1248 = sshll.u32 [#allocation5], 4
      %s1249 = int_to_ptr.vmem [resolvable:$true] %s1248
      %1251 = dma.vmem_to_hbm [thread:$0]  %s1249, 128, %s7, [#allocation6]
    $region37: #{tpu_custom_call.1} parent=1 // pred_fallthru
      _
    // Predicated region
    $region38: #{tpu_custom_call.1} parent=1 // pred_check
      _
    $region39: #{tpu_custom_call.1} parent=1 // pred_check_branch
      %1253 = sbr.rel (0) target = $region41
    $region40: #{tpu_custom_call.1} parent=1 // pred_region
      %1254 = dma.done [#allocation6], 128
    $region41: #{tpu_custom_call.1} parent=1 // pred_fallthru
      _
    %1255 = vsyncpa [#allocation6], 1

</llo_original>
